<compile_context>
chip_gen: v7x
topology: tpu7x:2x2x1
jax: 0.10.0
libtpu: 0.0.40
codegen_flags: <defaults>
</compile_context>

<pallas_src>
import jax
import jax.numpy as jnp
from jax.experimental import pallas as pl
from jax.experimental.pallas import tpu as pltpu

ATTN_DIM = 256  # hard-coded in the PyTorch module


# ----------------------------------------------------------------------------
# Fused Pallas kernel: attention -> LSTM recurrence -> vocab projection
# ----------------------------------------------------------------------------
def decoder_kernel(feat_ref, emb_ref, att_uw_ref, att_b_ref, att_aw_ref,
                   wih_ref, whh_ref, lstm_b_ref, lin_w_ref, lin_b_ref,
                   out_ref):
    f32, bf16 = jnp.float32, jnp.bfloat16
    B, E = feat_ref.shape
    T = out_ref.shape[0]          # time steps (1 attention step + T-1 caption steps)
    Tm1 = T - 1
    H4 = wih_ref.shape[1]
    H = H4 // 4
    V = lin_w_ref.shape[1]

    feats = feat_ref[...]                                            # (B, E)

    # ----------------- Attention (Attention.forward with h0 == 0) -----------
    # W(h0) == b_W for the zero-initialised hidden state, so the (H, A) matmul
    # is dead work; b_W is pre-folded into att_b by the wrapper.  The A-layer
    # bias shifts every score equally and cancels in the softmax.  Because
    # w_ah is constant across the batch, the reference's (1, B, B, 1)
    # cross-batch broadcast collapses to a single batch-axis softmax whose
    # context vector is identical for every batch row (reference-consistent).
    u = jnp.dot(feats.astype(bf16), att_uw_ref[...].astype(bf16),
                preferred_element_type=f32) + att_b_ref[...]         # (B, A)
    comb = jnp.tanh(u)                                               # (B, A)
    scores = jnp.sum(comb * att_aw_ref[...], axis=-1, keepdims=True)  # (B, 1)
    m = jnp.max(scores, axis=0, keepdims=True)
    e = jnp.exp(scores - m)
    alpha = e * pl.reciprocal(jnp.sum(e, axis=0, keepdims=True), approx=True)
    ctx = jnp.sum(alpha * feats, axis=0, keepdims=True)              # (1, E)
    att = jnp.broadcast_to(ctx, (B, E))                              # (B, E)

    # -------- LSTM: hoist x @ W_ih (+ fused b_ih + b_hh) out of the loop ----
    wih = wih_ref[...].astype(bf16)
    bias = lstm_b_ref[...]                                           # (1, 4H)
    gx0 = jnp.dot(att.astype(bf16), wih,
                  preferred_element_type=f32) + bias                 # (B, 4H)
    gx_rest = jnp.dot(emb_ref[...].astype(bf16), wih,
                      preferred_element_type=f32) + bias             # (Tm1*B, 4H)
    gx = [gx0] + [gx_rest[t * B:(t + 1) * B, :] for t in range(Tm1)]

    whh = whh_ref[...].astype(bf16)
    lin_w = lin_w_ref[...].astype(bf16)
    lin_b = jnp.broadcast_to(lin_b_ref[...], (B, V))                 # hoisted bcast

    h = jnp.zeros((B, H), f32)
    c = jnp.zeros((B, H), f32)
    # T is small and static -> fully unrolled recurrence so MXU/EUP/store work
    # from adjacent timesteps can interleave.  PyTorch gate order i, f, g, o.
    for t in range(T):
        gates = gx[t] + jnp.dot(h.astype(bf16), whh,
                                preferred_element_type=f32)          # (B, 4H)
        i_g = jax.nn.sigmoid(gates[:, 0:H])
        f_g = jax.nn.sigmoid(gates[:, H:2 * H])
        g_g = jnp.tanh(gates[:, 2 * H:3 * H])
        o_g = jax.nn.sigmoid(gates[:, 3 * H:4 * H])
        c = f_g * c + i_g * g_g
        h = o_g * jnp.tanh(c)
        # Vocab projection fused per step; it only depends on h (not on the
        # recurrence), so it hides under the serial sigmoid/tanh chain.
        out_ref[t] = jnp.dot(h.astype(bf16), lin_w,
                             preferred_element_type=f32) + lin_b     # (B, V)


# ----------------------------------------------------------------------------
# pallas_call wrapper (single fused kernel, no grid, full-array VMEM blocks)
# ----------------------------------------------------------------------------
def decoder_pallas(feats, emb_tb2d, att_uw, att_b, att_aw,
                   wih_t, whh_t, lstm_b, lin_w_t, lin_b, T):
    B = feats.shape[0]
    V = lin_w_t.shape[1]
    vmem = pl.BlockSpec(memory_space=pltpu.MemorySpace.VMEM)
    return pl.pallas_call(
        decoder_kernel,
        out_shape=jax.ShapeDtypeStruct((T, B, V), jnp.float32),      # time-major
        in_specs=[vmem] * 10,
        out_specs=vmem,
    )(feats, emb_tb2d, att_uw, att_b, att_aw, wih_t, whh_t, lstm_b, lin_w_t, lin_b)


# ----------------------------------------------------------------------------
# Parameters (deterministic, synthetic; mirrors the nn.Module's parameters)
# ----------------------------------------------------------------------------
def init_params(key, vocab_size, embed_size, hidden_size):
    ks = jax.random.split(key, 12)
    s = 0.1

    def rnd(k, shape):
        return (s * jax.random.normal(k, shape)).astype(jnp.float32)

    return {
        # nn.Embedding(vocab, embed)
        "embed_w": rnd(ks[0], (vocab_size, embed_size)),
        # nn.LSTM(embed, hidden): weights stored pre-transposed (in_dim, 4H)
        "lstm_wih_t": rnd(ks[1], (embed_size, 4 * hidden_size)),
        "lstm_whh_t": rnd(ks[2], (hidden_size, 4 * hidden_size)),
        "lstm_b": (rnd(ks[3], (1, 4 * hidden_size))
                   + rnd(ks[4], (1, 4 * hidden_size))),     # b_ih + b_hh fused
        # nn.Linear(hidden, vocab)
        "lin_w_t": rnd(ks[5], (hidden_size, vocab_size)),
        "lin_b": rnd(ks[6], (1, vocab_size)),
        # Attention(embed, hidden, 256)
        "att_uw": rnd(ks[7], (embed_size, ATTN_DIM)),
        "att_ub": rnd(ks[8], (1, ATTN_DIM)),
        "att_ww": rnd(ks[9], (hidden_size, ATTN_DIM)),   # unused: h0 == 0 in forward()
        "att_wb": rnd(ks[10], (1, ATTN_DIM)),
        "att_aw": rnd(ks[11], (1, ATTN_DIM)),
        "att_ab": jnp.zeros((1, 1), jnp.float32),        # uniform score shift; cancels in softmax
    }


# ----------------------------------------------------------------------------
# Forward pass (mirrors DecoderRNN.forward); one jitted dispatch total.
# ----------------------------------------------------------------------------
@jax.jit
def decoder_forward(params, features, captions):
    B, E = features.shape
    caps = captions[:, :-1]                                 # (B, T-1)
    embeds = params["embed_w"][caps]                        # (B, T-1, E) gather (XLA)
    # TODO(synk): nn.Dropout(0.5) implemented as eval-mode identity (stochastic in train mode).
    Tm1 = caps.shape[1]
    T = Tm1 + 1
    # Time-major, flattened to (Tm1*B, E) so the kernel hoists the W_ih matmul.
    emb_tb2d = jnp.transpose(embeds, (1, 0, 2)).reshape(Tm1 * B, E)
    # Fold U's bias with W(h0) == b_W (zero hidden state) into one bias operand.
    att_b = params["att_ub"] + params["att_wb"]
    out_tbv = decoder_pallas(features, emb_tb2d,
                             params["att_uw"], att_b, params["att_aw"],
                             params["lstm_wih_t"], params["lstm_whh_t"],
                             params["lstm_b"], params["lin_w_t"], params["lin_b"],
                             T)
    return jnp.transpose(out_tbv, (1, 0, 2))                # (B, T, V)


# ----------------------------------------------------------------------------
if __name__ == "__main__":
    key = jax.random.PRNGKey(0)
    B, T = 2, 8
    embed_size, hidden_size, vocab_size = 32, 32, 64

    k_feat, k_cap, k_par = jax.random.split(key, 3)
    features = jax.random.normal(k_feat, (B, embed_size), jnp.float32)
    captions = jax.random.randint(k_cap, (B, T), 0, vocab_size, jnp.int32)
    params = init_params(k_par, vocab_size, embed_size, hidden_size)

    out = decoder_forward(params, features, captions)
    out = jax.block_until_ready(out)
    assert out.shape == (B, T, vocab_size), out.shape
    assert bool(jnp.all(jnp.isfinite(out)))
    print("KERNEL_OK")
</pallas_src>

<mosaic_0001>
module attributes {stable_mosaic.version = 11 : i64} {
  func.func @decoder_kernel(%arg0: memref<2x32xf32, #tpu.memory_space<vmem>>, %arg1: memref<14x32xf32, #tpu.memory_space<vmem>>, %arg2: memref<32x256xf32, #tpu.memory_space<vmem>>, %arg3: memref<1x256xf32, #tpu.memory_space<vmem>>, %arg4: memref<1x256xf32, #tpu.memory_space<vmem>>, %arg5: memref<32x128xf32, #tpu.memory_space<vmem>>, %arg6: memref<32x128xf32, #tpu.memory_space<vmem>>, %arg7: memref<1x128xf32, #tpu.memory_space<vmem>>, %arg8: memref<32x64xf32, #tpu.memory_space<vmem>>, %arg9: memref<1x64xf32, #tpu.memory_space<vmem>>, %arg10: memref<8x2x64xf32, #tpu.memory_space<vmem>>) attributes {dimension_semantics = [], scalar_prefetch = 0 : i64, scratch_operands = 0 : i64, tpu.core_type = #tpu.core_type<tc>} {
    %c0 = arith.constant 0 : index
    %c0_0 = arith.constant 0 : index
    %0 = vector.load %arg0[%c0, %c0_0] : memref<2x32xf32, #tpu.memory_space<vmem>>, vector<2x32xf32>
    %1 = arith.truncf %0 : vector<2x32xf32> to vector<2x32xbf16>
    %c0_1 = arith.constant 0 : index
    %c0_2 = arith.constant 0 : index
    %2 = vector.load %arg2[%c0_1, %c0_2] : memref<32x256xf32, #tpu.memory_space<vmem>>, vector<32x256xf32>
    %3 = arith.truncf %2 : vector<32x256xf32> to vector<32x256xbf16>
    %cst = arith.constant dense<0.000000e+00> : vector<2x256xf32>
    %4 = tpu.matmul %1, %3, %cst {dimension_numbers = #tpu.dot_dimension_numbers<[1], [0], [0], [1], [0, 0, 1, 1], [], []>} : vector<2x32xbf16>, vector<32x256xbf16>, vector<2x256xf32> -> vector<2x256xf32>
    %c0_3 = arith.constant 0 : index
    %c0_4 = arith.constant 0 : index
    %5 = vector.load %arg3[%c0_3, %c0_4] : memref<1x256xf32, #tpu.memory_space<vmem>>, vector<1x256xf32>
    %6 = vector.broadcast %5 : vector<1x256xf32> to vector<2x256xf32>
    %7 = arith.addf %4, %6 : vector<2x256xf32>
    %8 = math.tanh %7 : vector<2x256xf32>
    %c0_5 = arith.constant 0 : index
    %c0_6 = arith.constant 0 : index
    %9 = vector.load %arg4[%c0_5, %c0_6] : memref<1x256xf32, #tpu.memory_space<vmem>>, vector<1x256xf32>
    %10 = vector.broadcast %9 : vector<1x256xf32> to vector<2x256xf32>
    %11 = arith.mulf %8, %10 : vector<2x256xf32>
    %cst_7 = arith.constant dense<0.000000e+00> : vector<2xf32>
    %12 = vector.multi_reduction <add>, %11, %cst_7 [1] : vector<2x256xf32> to vector<2xf32>
    %13 = vector.shape_cast %12 : vector<2xf32> to vector<2x1xf32>
    %cst_8 = arith.constant dense<0xFF800000> : vector<1xf32>
    %14 = vector.multi_reduction <maximumf>, %13, %cst_8 [0] : vector<2x1xf32> to vector<1xf32>
    %15 = vector.shape_cast %14 : vector<1xf32> to vector<1x1xf32>
    %16 = vector.broadcast %15 : vector<1x1xf32> to vector<2x1xf32>
    %17 = arith.subf %13, %16 : vector<2x1xf32>
    %18 = math.exp %17 : vector<2x1xf32>
    %cst_9 = arith.constant dense<0.000000e+00> : vector<1xf32>
    %19 = vector.multi_reduction <add>, %18, %cst_9 [0] : vector<2x1xf32> to vector<1xf32>
    %20 = vector.shape_cast %19 : vector<1xf32> to vector<1x1xf32>
    %21 = tpu.reciprocal %20 {approx = true} : vector<1x1xf32> -> vector<1x1xf32>
    %22 = vector.broadcast %21 : vector<1x1xf32> to vector<2x1xf32>
    %23 = arith.mulf %18, %22 : vector<2x1xf32>
    %24 = vector.broadcast %23 : vector<2x1xf32> to vector<2x32xf32>
    %25 = arith.mulf %24, %0 : vector<2x32xf32>
    %cst_10 = arith.constant dense<0.000000e+00> : vector<32xf32>
    %26 = vector.multi_reduction <add>, %25, %cst_10 [0] : vector<2x32xf32> to vector<32xf32>
    %27 = vector.shape_cast %26 : vector<32xf32> to vector<1x32xf32>
    %28 = vector.shape_cast %27 : vector<1x32xf32> to vector<1x32xf32>
    %29 = vector.broadcast %28 : vector<1x32xf32> to vector<2x32xf32>
    %c0_11 = arith.constant 0 : index
    %c0_12 = arith.constant 0 : index
    %30 = vector.load %arg5[%c0_11, %c0_12] : memref<32x128xf32, #tpu.memory_space<vmem>>, vector<32x128xf32>
    %31 = arith.truncf %30 : vector<32x128xf32> to vector<32x128xbf16>
    %c0_13 = arith.constant 0 : index
    %c0_14 = arith.constant 0 : index
    %32 = vector.load %arg7[%c0_13, %c0_14] : memref<1x128xf32, #tpu.memory_space<vmem>>, vector<1x128xf32>
    %33 = arith.truncf %29 : vector<2x32xf32> to vector<2x32xbf16>
    %cst_15 = arith.constant dense<0.000000e+00> : vector<2x128xf32>
    %34 = tpu.matmul %33, %31, %cst_15 {dimension_numbers = #tpu.dot_dimension_numbers<[1], [0], [0], [1], [0, 0, 1, 1], [], []>} : vector<2x32xbf16>, vector<32x128xbf16>, vector<2x128xf32> -> vector<2x128xf32>
    %35 = vector.broadcast %32 : vector<1x128xf32> to vector<2x128xf32>
    %36 = arith.addf %34, %35 : vector<2x128xf32>
    %c0_16 = arith.constant 0 : index
    %c0_17 = arith.constant 0 : index
    %37 = vector.load %arg1[%c0_16, %c0_17] : memref<14x32xf32, #tpu.memory_space<vmem>>, vector<14x32xf32>
    %38 = arith.truncf %37 : vector<14x32xf32> to vector<14x32xbf16>
    %cst_18 = arith.constant dense<0.000000e+00> : vector<14x128xf32>
    %39 = tpu.matmul %38, %31, %cst_18 {dimension_numbers = #tpu.dot_dimension_numbers<[1], [0], [0], [1], [0, 0, 1, 1], [], []>} : vector<14x32xbf16>, vector<32x128xbf16>, vector<14x128xf32> -> vector<14x128xf32>
    %40 = vector.broadcast %32 : vector<1x128xf32> to vector<14x128xf32>
    %41 = arith.addf %39, %40 : vector<14x128xf32>
    %42 = vector.extract_strided_slice %41 {offsets = [0, 0], sizes = [2, 128], strides = [1, 1]} : vector<14x128xf32> to vector<2x128xf32>
    %43 = vector.extract_strided_slice %41 {offsets = [2, 0], sizes = [2, 128], strides = [1, 1]} : vector<14x128xf32> to vector<2x128xf32>
    %44 = vector.extract_strided_slice %41 {offsets = [4, 0], sizes = [2, 128], strides = [1, 1]} : vector<14x128xf32> to vector<2x128xf32>
    %45 = vector.extract_strided_slice %41 {offsets = [6, 0], sizes = [2, 128], strides = [1, 1]} : vector<14x128xf32> to vector<2x128xf32>
    %46 = vector.extract_strided_slice %41 {offsets = [8, 0], sizes = [2, 128], strides = [1, 1]} : vector<14x128xf32> to vector<2x128xf32>
    %47 = vector.extract_strided_slice %41 {offsets = [10, 0], sizes = [2, 128], strides = [1, 1]} : vector<14x128xf32> to vector<2x128xf32>
    %48 = vector.extract_strided_slice %41 {offsets = [12, 0], sizes = [2, 128], strides = [1, 1]} : vector<14x128xf32> to vector<2x128xf32>
    %c0_19 = arith.constant 0 : index
    %c0_20 = arith.constant 0 : index
    %49 = vector.load %arg6[%c0_19, %c0_20] : memref<32x128xf32, #tpu.memory_space<vmem>>, vector<32x128xf32>
    %50 = arith.truncf %49 : vector<32x128xf32> to vector<32x128xbf16>
    %c0_21 = arith.constant 0 : index
    %c0_22 = arith.constant 0 : index
    %51 = vector.load %arg8[%c0_21, %c0_22] : memref<32x64xf32, #tpu.memory_space<vmem>>, vector<32x64xf32>
    %52 = arith.truncf %51 : vector<32x64xf32> to vector<32x64xbf16>
    %c0_23 = arith.constant 0 : index
    %c0_24 = arith.constant 0 : index
    %53 = vector.load %arg9[%c0_23, %c0_24] : memref<1x64xf32, #tpu.memory_space<vmem>>, vector<1x64xf32>
    %54 = vector.shape_cast %53 : vector<1x64xf32> to vector<1x64xf32>
    %55 = vector.broadcast %54 : vector<1x64xf32> to vector<2x64xf32>
    %cst_25 = arith.constant 0.000000e+00 : f32
    %56 = vector.broadcast %cst_25 : f32 to vector<2x32xf32>
    %cst_26 = arith.constant 0.000000e+00 : f32
    %57 = vector.broadcast %cst_26 : f32 to vector<2x32xf32>
    %58 = arith.truncf %56 : vector<2x32xf32> to vector<2x32xbf16>
    %cst_27 = arith.constant dense<0.000000e+00> : vector<2x128xf32>
    %59 = tpu.matmul %58, %50, %cst_27 {dimension_numbers = #tpu.dot_dimension_numbers<[1], [0], [0], [1], [0, 0, 1, 1], [], []>} : vector<2x32xbf16>, vector<32x128xbf16>, vector<2x128xf32> -> vector<2x128xf32>
    %60 = arith.addf %36, %59 : vector<2x128xf32>
    %61 = vector.extract_strided_slice %60 {offsets = [0, 0], sizes = [2, 32], strides = [1, 1]} : vector<2x128xf32> to vector<2x32xf32>
    %62 = arith.negf %61 : vector<2x32xf32>
    %63 = math.exp %62 : vector<2x32xf32>
    %cst_28 = arith.constant 1.000000e+00 : f32
    %64 = vector.broadcast %cst_28 : f32 to vector<2x32xf32>
    %65 = arith.addf %64, %63 : vector<2x32xf32>
    %66 = arith.divf %64, %65 : vector<2x32xf32>
    %67 = vector.extract_strided_slice %60 {offsets = [0, 32], sizes = [2, 32], strides = [1, 1]} : vector<2x128xf32> to vector<2x32xf32>
    %68 = arith.negf %67 : vector<2x32xf32>
    %69 = math.exp %68 : vector<2x32xf32>
    %cst_29 = arith.constant 1.000000e+00 : f32
    %70 = vector.broadcast %cst_29 : f32 to vector<2x32xf32>
    %71 = arith.addf %70, %69 : vector<2x32xf32>
    %72 = arith.divf %70, %71 : vector<2x32xf32>
    %73 = vector.extract_strided_slice %60 {offsets = [0, 64], sizes = [2, 32], strides = [1, 1]} : vector<2x128xf32> to vector<2x32xf32>
    %74 = math.tanh %73 : vector<2x32xf32>
    %75 = vector.extract_strided_slice %60 {offsets = [0, 96], sizes = [2, 32], strides = [1, 1]} : vector<2x128xf32> to vector<2x32xf32>
    %76 = arith.negf %75 : vector<2x32xf32>
    %77 = math.exp %76 : vector<2x32xf32>
    %cst_30 = arith.constant 1.000000e+00 : f32
    %78 = vector.broadcast %cst_30 : f32 to vector<2x32xf32>
    %79 = arith.addf %78, %77 : vector<2x32xf32>
    %80 = arith.divf %78, %79 : vector<2x32xf32>
    %81 = arith.mulf %72, %57 : vector<2x32xf32>
    %82 = arith.mulf %66, %74 : vector<2x32xf32>
    %83 = arith.addf %81, %82 : vector<2x32xf32>
    %84 = math.tanh %83 : vector<2x32xf32>
    %85 = arith.mulf %80, %84 : vector<2x32xf32>
    %86 = arith.truncf %85 : vector<2x32xf32> to vector<2x32xbf16>
    %cst_31 = arith.constant dense<0.000000e+00> : vector<2x64xf32>
    %87 = tpu.matmul %86, %52, %cst_31 {dimension_numbers = #tpu.dot_dimension_numbers<[1], [0], [0], [1], [0, 0, 1, 1], [], []>} : vector<2x32xbf16>, vector<32x64xbf16>, vector<2x64xf32> -> vector<2x64xf32>
    %88 = arith.addf %87, %55 : vector<2x64xf32>
    %c0_32 = arith.constant 0 : index
    %c0_33 = arith.constant 0 : index
    %c0_34 = arith.constant 0 : index
    %89 = vector.load %arg10[%c0_32, %c0_33, %c0_34] : memref<8x2x64xf32, #tpu.memory_space<vmem>>, vector<1x2x64xf32>
    %90 = vector.shape_cast %89 : vector<1x2x64xf32> to vector<2x64xf32>
    %91 = vector.shape_cast %88 : vector<2x64xf32> to vector<1x2x64xf32>
    tpu.vector_store %arg10[%c0_32, %c0_33, %c0_34], %91 {strides = array<i32>} : memref<8x2x64xf32, #tpu.memory_space<vmem>>, vector<1x2x64xf32>,
    %92 = arith.truncf %85 : vector<2x32xf32> to vector<2x32xbf16>
    %cst_35 = arith.constant dense<0.000000e+00> : vector<2x128xf32>
    %93 = tpu.matmul %92, %50, %cst_35 {dimension_numbers = #tpu.dot_dimension_numbers<[1], [0], [0], [1], [0, 0, 1, 1], [], []>} : vector<2x32xbf16>, vector<32x128xbf16>, vector<2x128xf32> -> vector<2x128xf32>
    %94 = arith.addf %42, %93 : vector<2x128xf32>
    %95 = vector.extract_strided_slice %94 {offsets = [0, 0], sizes = [2, 32], strides = [1, 1]} : vector<2x128xf32> to vector<2x32xf32>
    %96 = arith.negf %95 : vector<2x32xf32>
    %97 = math.exp %96 : vector<2x32xf32>
    %cst_36 = arith.constant 1.000000e+00 : f32
    %98 = vector.broadcast %cst_36 : f32 to vector<2x32xf32>
    %99 = arith.addf %98, %97 : vector<2x32xf32>
    %100 = arith.divf %98, %99 : vector<2x32xf32>
    %101 = vector.extract_strided_slice %94 {offsets = [0, 32], sizes = [2, 32], strides = [1, 1]} : vector<2x128xf32> to vector<2x32xf32>
    %102 = arith.negf %101 : vector<2x32xf32>
    %103 = math.exp %102 : vector<2x32xf32>
    %cst_37 = arith.constant 1.000000e+00 : f32
    %104 = vector.broadcast %cst_37 : f32 to vector<2x32xf32>
    %105 = arith.addf %104, %103 : vector<2x32xf32>
    %106 = arith.divf %104, %105 : vector<2x32xf32>
    %107 = vector.extract_strided_slice %94 {offsets = [0, 64], sizes = [2, 32], strides = [1, 1]} : vector<2x128xf32> to vector<2x32xf32>
    %108 = math.tanh %107 : vector<2x32xf32>
    %109 = vector.extract_strided_slice %94 {offsets = [0, 96], sizes = [2, 32], strides = [1, 1]} : vector<2x128xf32> to vector<2x32xf32>
    %110 = arith.negf %109 : vector<2x32xf32>
    %111 = math.exp %110 : vector<2x32xf32>
    %cst_38 = arith.constant 1.000000e+00 : f32
    %112 = vector.broadcast %cst_38 : f32 to vector<2x32xf32>
    %113 = arith.addf %112, %111 : vector<2x32xf32>
    %114 = arith.divf %112, %113 : vector<2x32xf32>
    %115 = arith.mulf %106, %83 : vector<2x32xf32>
    %116 = arith.mulf %100, %108 : vector<2x32xf32>
    %117 = arith.addf %115, %116 : vector<2x32xf32>
    %118 = math.tanh %117 : vector<2x32xf32>
    %119 = arith.mulf %114, %118 : vector<2x32xf32>
    %120 = arith.truncf %119 : vector<2x32xf32> to vector<2x32xbf16>
    %cst_39 = arith.constant dense<0.000000e+00> : vector<2x64xf32>
    %121 = tpu.matmul %120, %52, %cst_39 {dimension_numbers = #tpu.dot_dimension_numbers<[1], [0], [0], [1], [0, 0, 1, 1], [], []>} : vector<2x32xbf16>, vector<32x64xbf16>, vector<2x64xf32> -> vector<2x64xf32>
    %122 = arith.addf %121, %55 : vector<2x64xf32>
    %c1 = arith.constant 1 : index
    %c0_40 = arith.constant 0 : index
    %c0_41 = arith.constant 0 : index
    %123 = vector.load %arg10[%c1, %c0_40, %c0_41] : memref<8x2x64xf32, #tpu.memory_space<vmem>>, vector<1x2x64xf32>
    %124 = vector.shape_cast %123 : vector<1x2x64xf32> to vector<2x64xf32>
    %125 = vector.shape_cast %122 : vector<2x64xf32> to vector<1x2x64xf32>
    tpu.vector_store %arg10[%c1, %c0_40, %c0_41], %125 {strides = array<i32>} : memref<8x2x64xf32, #tpu.memory_space<vmem>>, vector<1x2x64xf32>,
    %126 = arith.truncf %119 : vector<2x32xf32> to vector<2x32xbf16>
    %cst_42 = arith.constant dense<0.000000e+00> : vector<2x128xf32>
    %127 = tpu.matmul %126, %50, %cst_42 {dimension_numbers = #tpu.dot_dimension_numbers<[1], [0], [0], [1], [0, 0, 1, 1], [], []>} : vector<2x32xbf16>, vector<32x128xbf16>, vector<2x128xf32> -> vector<2x128xf32>
    %128 = arith.addf %43, %127 : vector<2x128xf32>
    %129 = vector.extract_strided_slice %128 {offsets = [0, 0], sizes = [2, 32], strides = [1, 1]} : vector<2x128xf32> to vector<2x32xf32>
    %130 = arith.negf %129 : vector<2x32xf32>
    %131 = math.exp %130 : vector<2x32xf32>
    %cst_43 = arith.constant 1.000000e+00 : f32
    %132 = vector.broadcast %cst_43 : f32 to vector<2x32xf32>
    %133 = arith.addf %132, %131 : vector<2x32xf32>
    %134 = arith.divf %132, %133 : vector<2x32xf32>
    %135 = vector.extract_strided_slice %128 {offsets = [0, 32], sizes = [2, 32], strides = [1, 1]} : vector<2x128xf32> to vector<2x32xf32>
    %136 = arith.negf %135 : vector<2x32xf32>
    %137 = math.exp %136 : vector<2x32xf32>
    %cst_44 = arith.constant 1.000000e+00 : f32
    %138 = vector.broadcast %cst_44 : f32 to vector<2x32xf32>
    %139 = arith.addf %138, %137 : vector<2x32xf32>
    %140 = arith.divf %138, %139 : vector<2x32xf32>
    %141 = vector.extract_strided_slice %128 {offsets = [0, 64], sizes = [2, 32], strides = [1, 1]} : vector<2x128xf32> to vector<2x32xf32>
    %142 = math.tanh %141 : vector<2x32xf32>
    %143 = vector.extract_strided_slice %128 {offsets = [0, 96], sizes = [2, 32], strides = [1, 1]} : vector<2x128xf32> to vector<2x32xf32>
    %144 = arith.negf %143 : vector<2x32xf32>
    %145 = math.exp %144 : vector<2x32xf32>
    %cst_45 = arith.constant 1.000000e+00 : f32
    %146 = vector.broadcast %cst_45 : f32 to vector<2x32xf32>
    %147 = arith.addf %146, %145 : vector<2x32xf32>
    %148 = arith.divf %146, %147 : vector<2x32xf32>
    %149 = arith.mulf %140, %117 : vector<2x32xf32>
    %150 = arith.mulf %134, %142 : vector<2x32xf32>
    %151 = arith.addf %149, %150 : vector<2x32xf32>
    %152 = math.tanh %151 : vector<2x32xf32>
    %153 = arith.mulf %148, %152 : vector<2x32xf32>
    %154 = arith.truncf %153 : vector<2x32xf32> to vector<2x32xbf16>
    %cst_46 = arith.constant dense<0.000000e+00> : vector<2x64xf32>
    %155 = tpu.matmul %154, %52, %cst_46 {dimension_numbers = #tpu.dot_dimension_numbers<[1], [0], [0], [1], [0, 0, 1, 1], [], []>} : vector<2x32xbf16>, vector<32x64xbf16>, vector<2x64xf32> -> vector<2x64xf32>
    %156 = arith.addf %155, %55 : vector<2x64xf32>
    %c2 = arith.constant 2 : index
    %c0_47 = arith.constant 0 : index
    %c0_48 = arith.constant 0 : index
    %157 = vector.load %arg10[%c2, %c0_47, %c0_48] : memref<8x2x64xf32, #tpu.memory_space<vmem>>, vector<1x2x64xf32>
    %158 = vector.shape_cast %157 : vector<1x2x64xf32> to vector<2x64xf32>
    %159 = vector.shape_cast %156 : vector<2x64xf32> to vector<1x2x64xf32>
    tpu.vector_store %arg10[%c2, %c0_47, %c0_48], %159 {strides = array<i32>} : memref<8x2x64xf32, #tpu.memory_space<vmem>>, vector<1x2x64xf32>,
    %160 = arith.truncf %153 : vector<2x32xf32> to vector<2x32xbf16>
    %cst_49 = arith.constant dense<0.000000e+00> : vector<2x128xf32>
    %161 = tpu.matmul %160, %50, %cst_49 {dimension_numbers = #tpu.dot_dimension_numbers<[1], [0], [0], [1], [0, 0, 1, 1], [], []>} : vector<2x32xbf16>, vector<32x128xbf16>, vector<2x128xf32> -> vector<2x128xf32>
    %162 = arith.addf %44, %161 : vector<2x128xf32>
    %163 = vector.extract_strided_slice %162 {offsets = [0, 0], sizes = [2, 32], strides = [1, 1]} : vector<2x128xf32> to vector<2x32xf32>
    %164 = arith.negf %163 : vector<2x32xf32>
    %165 = math.exp %164 : vector<2x32xf32>
    %cst_50 = arith.constant 1.000000e+00 : f32
    %166 = vector.broadcast %cst_50 : f32 to vector<2x32xf32>
    %167 = arith.addf %166, %165 : vector<2x32xf32>
    %168 = arith.divf %166, %167 : vector<2x32xf32>
    %169 = vector.extract_strided_slice %162 {offsets = [0, 32], sizes = [2, 32], strides = [1, 1]} : vector<2x128xf32> to vector<2x32xf32>
    %170 = arith.negf %169 : vector<2x32xf32>
    %171 = math.exp %170 : vector<2x32xf32>
    %cst_51 = arith.constant 1.000000e+00 : f32
    %172 = vector.broadcast %cst_51 : f32 to vector<2x32xf32>
    %173 = arith.addf %172, %171 : vector<2x32xf32>
    %174 = arith.divf %172, %173 : vector<2x32xf32>
    %175 = vector.extract_strided_slice %162 {offsets = [0, 64], sizes = [2, 32], strides = [1, 1]} : vector<2x128xf32> to vector<2x32xf32>
    %176 = math.tanh %175 : vector<2x32xf32>
    %177 = vector.extract_strided_slice %162 {offsets = [0, 96], sizes = [2, 32], strides = [1, 1]} : vector<2x128xf32> to vector<2x32xf32>
    %178 = arith.negf %177 : vector<2x32xf32>
    %179 = math.exp %178 : vector<2x32xf32>
    %cst_52 = arith.constant 1.000000e+00 : f32
    %180 = vector.broadcast %cst_52 : f32 to vector<2x32xf32>
    %181 = arith.addf %180, %179 : vector<2x32xf32>
    %182 = arith.divf %180, %181 : vector<2x32xf32>
    %183 = arith.mulf %174, %151 : vector<2x32xf32>
    %184 = arith.mulf %168, %176 : vector<2x32xf32>
    %185 = arith.addf %183, %184 : vector<2x32xf32>
    %186 = math.tanh %185 : vector<2x32xf32>
    %187 = arith.mulf %182, %186 : vector<2x32xf32>
    %188 = arith.truncf %187 : vector<2x32xf32> to vector<2x32xbf16>
    %cst_53 = arith.constant dense<0.000000e+00> : vector<2x64xf32>
    %189 = tpu.matmul %188, %52, %cst_53 {dimension_numbers = #tpu.dot_dimension_numbers<[1], [0], [0], [1], [0, 0, 1, 1], [], []>} : vector<2x32xbf16>, vector<32x64xbf16>, vector<2x64xf32> -> vector<2x64xf32>
    %190 = arith.addf %189, %55 : vector<2x64xf32>
    %c3 = arith.constant 3 : index
    %c0_54 = arith.constant 0 : index
    %c0_55 = arith.constant 0 : index
    %191 = vector.load %arg10[%c3, %c0_54, %c0_55] : memref<8x2x64xf32, #tpu.memory_space<vmem>>, vector<1x2x64xf32>
    %192 = vector.shape_cast %191 : vector<1x2x64xf32> to vector<2x64xf32>
    %193 = vector.shape_cast %190 : vector<2x64xf32> to vector<1x2x64xf32>
    tpu.vector_store %arg10[%c3, %c0_54, %c0_55], %193 {strides = array<i32>} : memref<8x2x64xf32, #tpu.memory_space<vmem>>, vector<1x2x64xf32>,
    %194 = arith.truncf %187 : vector<2x32xf32> to vector<2x32xbf16>
    %cst_56 = arith.constant dense<0.000000e+00> : vector<2x128xf32>
    %195 = tpu.matmul %194, %50, %cst_56 {dimension_numbers = #tpu.dot_dimension_numbers<[1], [0], [0], [1], [0, 0, 1, 1], [], []>} : vector<2x32xbf16>, vector<32x128xbf16>, vector<2x128xf32> -> vector<2x128xf32>
    %196 = arith.addf %45, %195 : vector<2x128xf32>
    %197 = vector.extract_strided_slice %196 {offsets = [0, 0], sizes = [2, 32], strides = [1, 1]} : vector<2x128xf32> to vector<2x32xf32>
    %198 = arith.negf %197 : vector<2x32xf32>
    %199 = math.exp %198 : vector<2x32xf32>
    %cst_57 = arith.constant 1.000000e+00 : f32
    %200 = vector.broadcast %cst_57 : f32 to vector<2x32xf32>
    %201 = arith.addf %200, %199 : vector<2x32xf32>
    %202 = arith.divf %200, %201 : vector<2x32xf32>
    %203 = vector.extract_strided_slice %196 {offsets = [0, 32], sizes = [2, 32], strides = [1, 1]} : vector<2x128xf32> to vector<2x32xf32>
    %204 = arith.negf %203 : vector<2x32xf32>
    %205 = math.exp %204 : vector<2x32xf32>
    %cst_58 = arith.constant 1.000000e+00 : f32
    %206 = vector.broadcast %cst_58 : f32 to vector<2x32xf32>
    %207 = arith.addf %206, %205 : vector<2x32xf32>
    %208 = arith.divf %206, %207 : vector<2x32xf32>
    %209 = vector.extract_strided_slice %196 {offsets = [0, 64], sizes = [2, 32], strides = [1, 1]} : vector<2x128xf32> to vector<2x32xf32>
    %210 = math.tanh %209 : vector<2x32xf32>
    %211 = vector.extract_strided_slice %196 {offsets = [0, 96], sizes = [2, 32], strides = [1, 1]} : vector<2x128xf32> to vector<2x32xf32>
    %212 = arith.negf %211 : vector<2x32xf32>
    %213 = math.exp %212 : vector<2x32xf32>
    %cst_59 = arith.constant 1.000000e+00 : f32
    %214 = vector.broadcast %cst_59 : f32 to vector<2x32xf32>
    %215 = arith.addf %214, %213 : vector<2x32xf32>
    %216 = arith.divf %214, %215 : vector<2x32xf32>
    %217 = arith.mulf %208, %185 : vector<2x32xf32>
    %218 = arith.mulf %202, %210 : vector<2x32xf32>
    %219 = arith.addf %217, %218 : vector<2x32xf32>
    %220 = math.tanh %219 : vector<2x32xf32>
    %221 = arith.mulf %216, %220 : vector<2x32xf32>
    %222 = arith.truncf %221 : vector<2x32xf32> to vector<2x32xbf16>
    %cst_60 = arith.constant dense<0.000000e+00> : vector<2x64xf32>
    %223 = tpu.matmul %222, %52, %cst_60 {dimension_numbers = #tpu.dot_dimension_numbers<[1], [0], [0], [1], [0, 0, 1, 1], [], []>} : vector<2x32xbf16>, vector<32x64xbf16>, vector<2x64xf32> -> vector<2x64xf32>
    %224 = arith.addf %223, %55 : vector<2x64xf32>
    %c4 = arith.constant 4 : index
    %c0_61 = arith.constant 0 : index
    %c0_62 = arith.constant 0 : index
    %225 = vector.load %arg10[%c4, %c0_61, %c0_62] : memref<8x2x64xf32, #tpu.memory_space<vmem>>, vector<1x2x64xf32>
    %226 = vector.shape_cast %225 : vector<1x2x64xf32> to vector<2x64xf32>
    %227 = vector.shape_cast %224 : vector<2x64xf32> to vector<1x2x64xf32>
    tpu.vector_store %arg10[%c4, %c0_61, %c0_62], %227 {strides = array<i32>} : memref<8x2x64xf32, #tpu.memory_space<vmem>>, vector<1x2x64xf32>,
    %228 = arith.truncf %221 : vector<2x32xf32> to vector<2x32xbf16>
    %cst_63 = arith.constant dense<0.000000e+00> : vector<2x128xf32>
    %229 = tpu.matmul %228, %50, %cst_63 {dimension_numbers = #tpu.dot_dimension_numbers<[1], [0], [0], [1], [0, 0, 1, 1], [], []>} : vector<2x32xbf16>, vector<32x128xbf16>, vector<2x128xf32> -> vector<2x128xf32>
    %230 = arith.addf %46, %229 : vector<2x128xf32>
    %231 = vector.extract_strided_slice %230 {offsets = [0, 0], sizes = [2, 32], strides = [1, 1]} : vector<2x128xf32> to vector<2x32xf32>
    %232 = arith.negf %231 : vector<2x32xf32>
    %233 = math.exp %232 : vector<2x32xf32>
    %cst_64 = arith.constant 1.000000e+00 : f32
    %234 = vector.broadcast %cst_64 : f32 to vector<2x32xf32>
    %235 = arith.addf %234, %233 : vector<2x32xf32>
    %236 = arith.divf %234, %235 : vector<2x32xf32>
    %237 = vector.extract_strided_slice %230 {offsets = [0, 32], sizes = [2, 32], strides = [1, 1]} : vector<2x128xf32> to vector<2x32xf32>
    %238 = arith.negf %237 : vector<2x32xf32>
    %239 = math.exp %238 : vector<2x32xf32>
    %cst_65 = arith.constant 1.000000e+00 : f32
    %240 = vector.broadcast %cst_65 : f32 to vector<2x32xf32>
    %241 = arith.addf %240, %239 : vector<2x32xf32>
    %242 = arith.divf %240, %241 : vector<2x32xf32>
    %243 = vector.extract_strided_slice %230 {offsets = [0, 64], sizes = [2, 32], strides = [1, 1]} : vector<2x128xf32> to vector<2x32xf32>
    %244 = math.tanh %243 : vector<2x32xf32>
    %245 = vector.extract_strided_slice %230 {offsets = [0, 96], sizes = [2, 32], strides = [1, 1]} : vector<2x128xf32> to vector<2x32xf32>
    %246 = arith.negf %245 : vector<2x32xf32>
    %247 = math.exp %246 : vector<2x32xf32>
    %cst_66 = arith.constant 1.000000e+00 : f32
    %248 = vector.broadcast %cst_66 : f32 to vector<2x32xf32>
    %249 = arith.addf %248, %247 : vector<2x32xf32>
    %250 = arith.divf %248, %249 : vector<2x32xf32>
    %251 = arith.mulf %242, %219 : vector<2x32xf32>
    %252 = arith.mulf %236, %244 : vector<2x32xf32>
    %253 = arith.addf %251, %252 : vector<2x32xf32>
    %254 = math.tanh %253 : vector<2x32xf32>
    %255 = arith.mulf %250, %254 : vector<2x32xf32>
    %256 = arith.truncf %255 : vector<2x32xf32> to vector<2x32xbf16>
    %cst_67 = arith.constant dense<0.000000e+00> : vector<2x64xf32>
    %257 = tpu.matmul %256, %52, %cst_67 {dimension_numbers = #tpu.dot_dimension_numbers<[1], [0], [0], [1], [0, 0, 1, 1], [], []>} : vector<2x32xbf16>, vector<32x64xbf16>, vector<2x64xf32> -> vector<2x64xf32>
    %258 = arith.addf %257, %55 : vector<2x64xf32>
    %c5 = arith.constant 5 : index
    %c0_68 = arith.constant 0 : index
    %c0_69 = arith.constant 0 : index
    %259 = vector.load %arg10[%c5, %c0_68, %c0_69] : memref<8x2x64xf32, #tpu.memory_space<vmem>>, vector<1x2x64xf32>
    %260 = vector.shape_cast %259 : vector<1x2x64xf32> to vector<2x64xf32>
    %261 = vector.shape_cast %258 : vector<2x64xf32> to vector<1x2x64xf32>
    tpu.vector_store %arg10[%c5, %c0_68, %c0_69], %261 {strides = array<i32>} : memref<8x2x64xf32, #tpu.memory_space<vmem>>, vector<1x2x64xf32>,
    %262 = arith.truncf %255 : vector<2x32xf32> to vector<2x32xbf16>
    %cst_70 = arith.constant dense<0.000000e+00> : vector<2x128xf32>
    %263 = tpu.matmul %262, %50, %cst_70 {dimension_numbers = #tpu.dot_dimension_numbers<[1], [0], [0], [1], [0, 0, 1, 1], [], []>} : vector<2x32xbf16>, vector<32x128xbf16>, vector<2x128xf32> -> vector<2x128xf32>
    %264 = arith.addf %47, %263 : vector<2x128xf32>
    %265 = vector.extract_strided_slice %264 {offsets = [0, 0], sizes = [2, 32], strides = [1, 1]} : vector<2x128xf32> to vector<2x32xf32>
    %266 = arith.negf %265 : vector<2x32xf32>
    %267 = math.exp %266 : vector<2x32xf32>
    %cst_71 = arith.constant 1.000000e+00 : f32
    %268 = vector.broadcast %cst_71 : f32 to vector<2x32xf32>
    %269 = arith.addf %268, %267 : vector<2x32xf32>
    %270 = arith.divf %268, %269 : vector<2x32xf32>
    %271 = vector.extract_strided_slice %264 {offsets = [0, 32], sizes = [2, 32], strides = [1, 1]} : vector<2x128xf32> to vector<2x32xf32>
    %272 = arith.negf %271 : vector<2x32xf32>
    %273 = math.exp %272 : vector<2x32xf32>
    %cst_72 = arith.constant 1.000000e+00 : f32
    %274 = vector.broadcast %cst_72 : f32 to vector<2x32xf32>
    %275 = arith.addf %274, %273 : vector<2x32xf32>
    %276 = arith.divf %274, %275 : vector<2x32xf32>
    %277 = vector.extract_strided_slice %264 {offsets = [0, 64], sizes = [2, 32], strides = [1, 1]} : vector<2x128xf32> to vector<2x32xf32>
    %278 = math.tanh %277 : vector<2x32xf32>
    %279 = vector.extract_strided_slice %264 {offsets = [0, 96], sizes = [2, 32], strides = [1, 1]} : vector<2x128xf32> to vector<2x32xf32>
    %280 = arith.negf %279 : vector<2x32xf32>
    %281 = math.exp %280 : vector<2x32xf32>
    %cst_73 = arith.constant 1.000000e+00 : f32
    %282 = vector.broadcast %cst_73 : f32 to vector<2x32xf32>
    %283 = arith.addf %282, %281 : vector<2x32xf32>
    %284 = arith.divf %282, %283 : vector<2x32xf32>
    %285 = arith.mulf %276, %253 : vector<2x32xf32>
    %286 = arith.mulf %270, %278 : vector<2x32xf32>
    %287 = arith.addf %285, %286 : vector<2x32xf32>
    %288 = math.tanh %287 : vector<2x32xf32>
    %289 = arith.mulf %284, %288 : vector<2x32xf32>
    %290 = arith.truncf %289 : vector<2x32xf32> to vector<2x32xbf16>
    %cst_74 = arith.constant dense<0.000000e+00> : vector<2x64xf32>
    %291 = tpu.matmul %290, %52, %cst_74 {dimension_numbers = #tpu.dot_dimension_numbers<[1], [0], [0], [1], [0, 0, 1, 1], [], []>} : vector<2x32xbf16>, vector<32x64xbf16>, vector<2x64xf32> -> vector<2x64xf32>
    %292 = arith.addf %291, %55 : vector<2x64xf32>
    %c6 = arith.constant 6 : index
    %c0_75 = arith.constant 0 : index
    %c0_76 = arith.constant 0 : index
    %293 = vector.load %arg10[%c6, %c0_75, %c0_76] : memref<8x2x64xf32, #tpu.memory_space<vmem>>, vector<1x2x64xf32>
    %294 = vector.shape_cast %293 : vector<1x2x64xf32> to vector<2x64xf32>
    %295 = vector.shape_cast %292 : vector<2x64xf32> to vector<1x2x64xf32>
    tpu.vector_store %arg10[%c6, %c0_75, %c0_76], %295 {strides = array<i32>} : memref<8x2x64xf32, #tpu.memory_space<vmem>>, vector<1x2x64xf32>,
    %296 = arith.truncf %289 : vector<2x32xf32> to vector<2x32xbf16>
    %cst_77 = arith.constant dense<0.000000e+00> : vector<2x128xf32>
    %297 = tpu.matmul %296, %50, %cst_77 {dimension_numbers = #tpu.dot_dimension_numbers<[1], [0], [0], [1], [0, 0, 1, 1], [], []>} : vector<2x32xbf16>, vector<32x128xbf16>, vector<2x128xf32> -> vector<2x128xf32>
    %298 = arith.addf %48, %297 : vector<2x128xf32>
    %299 = vector.extract_strided_slice %298 {offsets = [0, 0], sizes = [2, 32], strides = [1, 1]} : vector<2x128xf32> to vector<2x32xf32>
    %300 = arith.negf %299 : vector<2x32xf32>
    %301 = math.exp %300 : vector<2x32xf32>
    %cst_78 = arith.constant 1.000000e+00 : f32
    %302 = vector.broadcast %cst_78 : f32 to vector<2x32xf32>
    %303 = arith.addf %302, %301 : vector<2x32xf32>
    %304 = arith.divf %302, %303 : vector<2x32xf32>
    %305 = vector.extract_strided_slice %298 {offsets = [0, 32], sizes = [2, 32], strides = [1, 1]} : vector<2x128xf32> to vector<2x32xf32>
    %306 = arith.negf %305 : vector<2x32xf32>
    %307 = math.exp %306 : vector<2x32xf32>
    %cst_79 = arith.constant 1.000000e+00 : f32
    %308 = vector.broadcast %cst_79 : f32 to vector<2x32xf32>
    %309 = arith.addf %308, %307 : vector<2x32xf32>
    %310 = arith.divf %308, %309 : vector<2x32xf32>
    %311 = vector.extract_strided_slice %298 {offsets = [0, 64], sizes = [2, 32], strides = [1, 1]} : vector<2x128xf32> to vector<2x32xf32>
    %312 = math.tanh %311 : vector<2x32xf32>
    %313 = vector.extract_strided_slice %298 {offsets = [0, 96], sizes = [2, 32], strides = [1, 1]} : vector<2x128xf32> to vector<2x32xf32>
    %314 = arith.negf %313 : vector<2x32xf32>
    %315 = math.exp %314 : vector<2x32xf32>
    %cst_80 = arith.constant 1.000000e+00 : f32
    %316 = vector.broadcast %cst_80 : f32 to vector<2x32xf32>
    %317 = arith.addf %316, %315 : vector<2x32xf32>
    %318 = arith.divf %316, %317 : vector<2x32xf32>
    %319 = arith.mulf %310, %287 : vector<2x32xf32>
    %320 = arith.mulf %304, %312 : vector<2x32xf32>
    %321 = arith.addf %319, %320 : vector<2x32xf32>
    %322 = math.tanh %321 : vector<2x32xf32>
    %323 = arith.mulf %318, %322 : vector<2x32xf32>
    %324 = arith.truncf %323 : vector<2x32xf32> to vector<2x32xbf16>
    %cst_81 = arith.constant dense<0.000000e+00> : vector<2x64xf32>
    %325 = tpu.matmul %324, %52, %cst_81 {dimension_numbers = #tpu.dot_dimension_numbers<[1], [0], [0], [1], [0, 0, 1, 1], [], []>} : vector<2x32xbf16>, vector<32x64xbf16>, vector<2x64xf32> -> vector<2x64xf32>
    %326 = arith.addf %325, %55 : vector<2x64xf32>
    %c7 = arith.constant 7 : index
    %c0_82 = arith.constant 0 : index
    %c0_83 = arith.constant 0 : index
    %327 = vector.load %arg10[%c7, %c0_82, %c0_83] : memref<8x2x64xf32, #tpu.memory_space<vmem>>, vector<1x2x64xf32>
    %328 = vector.shape_cast %327 : vector<1x2x64xf32> to vector<2x64xf32>
    %329 = vector.shape_cast %326 : vector<2x64xf32> to vector<1x2x64xf32>
    tpu.vector_store %arg10[%c7, %c0_82, %c0_83], %329 {strides = array<i32>} : memref<8x2x64xf32, #tpu.memory_space<vmem>>, vector<1x2x64xf32>,
    return
  }
}

</mosaic_0001>

<llo_original>
// kernel: decoder_forward.1
$region0: #{decoder_forward.1}
  #allocation0 [shape = 'u32[]', space=smem, size = 0x4, offset = 0x4, fixed_abs, tag = 'smem constant byte address 0x4 - core index']
  #allocation1 [shape = 'u32[144,128]{1,0:T(1,128)}', space=vmem, size = 0x12000, scoped, tag = 'internal scratch']
  %s0 = inlined_call_operand.vmem [shape: f32[2,32], index: 0, kind: input, shape index: {}]
  %s1 = inlined_call_operand.vmem [shape: f32[14,32], index: 1, kind: input, shape index: {}]
  %s2 = inlined_call_operand.vmem [shape: f32[32,256], index: 2, kind: input, shape index: {}]
  %s3 = inlined_call_operand.vmem [shape: f32[1,256], index: 3, kind: input, shape index: {}]
  %s4 = inlined_call_operand.vmem [shape: f32[1,256], index: 4, kind: input, shape index: {}]
  %s5 = inlined_call_operand.vmem [shape: f32[32,128], index: 5, kind: input, shape index: {}]
  %s6 = inlined_call_operand.vmem [shape: f32[32,128], index: 6, kind: input, shape index: {}]
  %s7 = inlined_call_operand.vmem [shape: f32[1,128], index: 7, kind: input, shape index: {}]
  %s8 = inlined_call_operand.vmem [shape: f32[32,64], index: 8, kind: input, shape index: {}]
  %s9 = inlined_call_operand.vmem [shape: f32[1,64], index: 9, kind: input, shape index: {}]
  %s10 = inlined_call_operand.vmem [shape: f32[8,2,64], index: 10, kind: output, shape index: {}]
  %s11 = sld [smem:[#allocation0]]
  $region50: #{decoder_forward.1} parent=0
    _
  %s13 = ssub.s32 1, %s11
  %s14 = scalar_select 0, %s13, %s11
  // Predicated region
  $region2: #{decoder_forward.1} parent=0 // pred_check
    _
  $region3: #{decoder_forward.1} parent=0 // pred_check_branch
    %16 = sbr.rel (0) target = $region5
  $region4: #{decoder_forward.1} parent=0 // pred_region
    _
  $region5: #{decoder_forward.1} parent=0 // pred_fallthru
    _
  // Predicated region
  $region6: #{decoder_forward.1} parent=0 // pred_check
    _
  $region7: #{decoder_forward.1} parent=0 // pred_check_branch
    %18 = sbr.rel (0) target = $region9
  $region8: #{decoder_forward.1} parent=0 // pred_region
    _
  $region9: #{decoder_forward.1} parent=0 // pred_fallthru
    _
  // Predicated region
  $region10: #{decoder_forward.1} parent=0 // pred_check
    _
  $region11: #{decoder_forward.1} parent=0 // pred_check_branch
    %20 = sbr.rel (0) target = $region13
  $region12: #{decoder_forward.1} parent=0 // pred_region
    _
  $region13: #{decoder_forward.1} parent=0 // pred_fallthru
    _
  // Predicated region
  $region14: #{decoder_forward.1} parent=0 // pred_check
    _
  $region15: #{decoder_forward.1} parent=0 // pred_check_branch
    %22 = sbr.rel (0) target = $region17
  $region16: #{decoder_forward.1} parent=0 // pred_region
    _
  $region17: #{decoder_forward.1} parent=0 // pred_fallthru
    _
  // Predicated region
  $region18: #{decoder_forward.1} parent=0 // pred_check
    _
  $region19: #{decoder_forward.1} parent=0 // pred_check_branch
    %24 = sbr.rel (0) target = $region21
  $region20: #{decoder_forward.1} parent=0 // pred_region
    _
  $region21: #{decoder_forward.1} parent=0 // pred_fallthru
    _
  // Predicated region
  $region22: #{decoder_forward.1} parent=0 // pred_check
    _
  $region23: #{decoder_forward.1} parent=0 // pred_check_branch
    %26 = sbr.rel (0) target = $region25
  $region24: #{decoder_forward.1} parent=0 // pred_region
    _
  $region25: #{decoder_forward.1} parent=0 // pred_fallthru
    _
  // Predicated region
  $region26: #{decoder_forward.1} parent=0 // pred_check
    _
  $region27: #{decoder_forward.1} parent=0 // pred_check_branch
    %28 = sbr.rel (0) target = $region29
  $region28: #{decoder_forward.1} parent=0 // pred_region
    _
  $region29: #{decoder_forward.1} parent=0 // pred_fallthru
    _
  // Predicated region
  $region30: #{decoder_forward.1} parent=0 // pred_check
    _
  $region31: #{decoder_forward.1} parent=0 // pred_check_branch
    %30 = sbr.rel (0) target = $region33
  $region32: #{decoder_forward.1} parent=0 // pred_region
    _
  $region33: #{decoder_forward.1} parent=0 // pred_fallthru
    _
  // Predicated region
  $region34: #{decoder_forward.1} parent=0 // pred_check
    _
  $region35: #{decoder_forward.1} parent=0 // pred_check_branch
    %32 = sbr.rel (0) target = $region37
  $region36: #{decoder_forward.1} parent=0 // pred_region
    _
  $region37: #{decoder_forward.1} parent=0 // pred_fallthru
    _
  // Predicated region
  $region38: #{decoder_forward.1} parent=0 // pred_check
    _
  $region39: #{decoder_forward.1} parent=0 // pred_check_branch
    %34 = sbr.rel (0) target = $region41
  $region40: #{decoder_forward.1} parent=0 // pred_region
    _
  $region41: #{decoder_forward.1} parent=0 // pred_fallthru
    _
  %v36 = vld [vmem:[%s0] sm:$0x3]
  %v37 = vpack.c.bf16 %v36, %v36
  %v38 = vld [vmem:[%s2] sm:$0xff]
  %v39 = vld [vmem:[%s2 + $0x8] sm:$0xff]
  %v40 = vld [vmem:[%s2 + $0x10] sm:$0xff]
  %v41 = vld [vmem:[%s2 + $0x18] sm:$0xff]
  %v42 = vld [vmem:[%s2 + $0x20] sm:$0xff]
  %v43 = vld [vmem:[%s2 + $0x28] sm:$0xff]
  %v44 = vld [vmem:[%s2 + $0x30] sm:$0xff]
  %v45 = vld [vmem:[%s2 + $0x38] sm:$0xff]
  %v46 = vpack.c.bf16 %v40, %v38
  %v47 = vpack.c.bf16 %v41, %v39
  %v48 = vpack.c.bf16 %v44, %v42
  %v49 = vpack.c.bf16 %v45, %v43
  %v50 = vld [vmem:[%s3] sm:$0x3]
  %v52 = vlaneseq
  %v53 = vshrl.u32 %v52, 7
  %v54 = vsub.s32 0, %v53
  %v55 = vrot.slane %v50, %v54
  %v56 = vlaneseq
  %v57 = vshrl.u32 %v56, 7
  %v58 = vsub.s32 1, %v57
  %v59 = vrot.slane %v50, %v58
  %vm62 = vcmask 261120
  %v64 = vsel %vm62, %v37, 0
  %66 = vmatprep.subr.bf16.mxu0 %v47
  %67 = vmatpush1.bf16.msra.mxu0 %v46
  %68 = vmatprep.subr.bf16.mxu0 %v49
  %69 = vmatpush1.bf16.msra.mxu0 %v48
  %70 = vmatprep.subr.bf16.mxu0 0
  %71 = vmatpush1.bf16.msra.mxu0 0
  %72 = vmatprep.subr.bf16.mxu0 0
  %73 = vmatpush1.bf16.msra.mxu0 0
  %74 = vmatprep.subr.bf16.mxu0 0
  %75 = vmatpush1.bf16.msra.mxu0 0
  %76 = vmatprep.subr.bf16.mxu0 0
  %77 = vmatpush1.bf16.msra.mxu0 0
  %78 = vmatprep.subr.bf16.mxu0 0
  %79 = vmatpush1.bf16.msra.mxu0 0
  %80 = vmatprep.subr.bf16.mxu0 0
  %81 = vmatpush1.bf16.msra.mxu0 0
  %82 = vmatprep.subr.bf16.mxu0 0
  %83 = vmatpush1.bf16.msra.mxu0 0
  %84 = vmatprep.subr.bf16.mxu0 0
  %85 = vmatpush1.bf16.msra.mxu0 0
  %86 = vmatprep.subr.bf16.mxu0 0
  %87 = vmatpush1.bf16.msra.mxu0 0
  %88 = vmatprep.subr.bf16.mxu0 0
  %89 = vmatpush1.bf16.msra.mxu0 0
  %90 = vmatprep.subr.bf16.mxu0 0
  %91 = vmatpush1.bf16.msra.mxu0 0
  %92 = vmatprep.subr.bf16.mxu0 0
  %93 = vmatpush1.bf16.msra.mxu0 0
  %94 = vmatprep.subr.bf16.mxu0 0
  %95 = vmatpush1.bf16.msra.mxu0 0
  %96 = vmatprep.subr.bf16.mxu0 0
  %97 = vmatpush1.bf16.msra.mxu0 0
  %98 = vmatprep.mubr.bf16.mxu0 0
  %99 = vmatmul.mubr.bf16.gmra.mrb[0].mxu0 %v64
  %v100 = vpop.f32.mrb[0].mxu0
  %v101 = vadd.f32 %v55, %v100
  %v102 = vpop.f32.mrb[0].mxu0
  %v103 = vadd.f32 %v59, %v102
  %v104 = vpop.f32.mrb[0].mxu0
  %v105 = vpop.f32.mrb[0].mxu0
  %106 = vdwg.mxu0
  %v107 = vtanh.pop %v101
  %v108 = vtanh.pop %v103
  %v109 = vld [vmem:[%s4] sm:$0x3]
  %v111 = vlaneseq
  %v112 = vshrl.u32 %v111, 7
  %v113 = vsub.s32 0, %v112
  %v114 = vrot.slane %v109, %v113
  %v115 = vlaneseq
  %v116 = vshrl.u32 %v115, 7
  %v117 = vsub.s32 1, %v116
  %v118 = vrot.slane %v109, %v117
  %v121 = vmul.f32 %v107, %v114
  %v122 = vmul.f32 %v108, %v118
  %vm123 = vcmask 1041408
  %v124 = vsel %vm123, %v121, 0.0
  %v125 = vsel %vm123, %v122, 0.0
  %v126 = vadd.f32 %v124, %v125
  %127 = vadd.xlane.f32.xlu0 %v126
  %v128 = vpop.xlane.xlu0 %127
  %v129 = vsel %vm123, %v128, -inf
  %v130 = vrot.slane %v129, 4
  %v131 = vmax.f32 %v129, %v130
  %v132 = vrot.slane %v131, 2
  %v133 = vmax.f32 %v131, %v132
  %v134 = vrot.slane %v133, 1
  %v135 = vmax.f32 %v133, %v134
  %v136 = vsub.f32 %v128, %v135
  %v137 = vmul.f32 %v136, 1.442695
  %v138 = vpow.pop %v137
  %v139 = vsel %vm123, %v138, 0.0
  %v140 = vrot.slane %v139, 4
  %v141 = vadd.f32 %v139, %v140
  %v142 = vrot.slane %v141, 2
  %v143 = vadd.f32 %v141, %v142
  %v144 = vrot.slane %v143, 1
  %v145 = vadd.f32 %v143, %v144
  %v146 = vrcp.pop %v145
  %v147 = vmul.f32 %v138, %v146
  %v148 = vmul.f32 %v147, %v36
  %vm149 = vcmask 254976
  %v150 = vsel %vm149, %v148, 0.0
  %v151 = vrot.slane %v150, 4
  %v152 = vadd.f32 %v150, %v151
  %v153 = vrot.slane %v152, 2
  %v154 = vadd.f32 %v152, %v153
  %v155 = vrot.slane %v154, 1
  %v156 = vadd.f32 %v154, %v155
  %v157 = vld [vmem:[%s5] sm:$0xff]
  %v158 = vld [vmem:[%s5 + $0x8] sm:$0xff]
  %v159 = vld [vmem:[%s5 + $0x10] sm:$0xff]
  %v160 = vld [vmem:[%s5 + $0x18] sm:$0xff]
  %v161 = vpack.c.bf16 %v158, %v157
  %v162 = vpack.c.bf16 %v160, %v159
  %v163 = vld [vmem:[%s7] sm:$0x1]
  %v164 = vpack.c.bf16 %v156, %v156
  %v166 = vlaneseq
  %v167 = vshrl.u32 %v166, 7
  %v168 = vsub.s32 0, %v167
  %v169 = vrot.slane %v163, %v168
  %v172 = vsel %vm62, %v164, 0
  %174 = vmatprep.subr.bf16.mxu0 0
  %175 = vmatpush1.bf16.msra.mxu0 %v161
  %176 = vmatprep.subr.bf16.mxu0 0
  %177 = vmatpush1.bf16.msra.mxu0 %v162
  %178 = vmatprep.subr.bf16.mxu0 0
  %179 = vmatpush1.bf16.msra.mxu0 0
  %180 = vmatprep.subr.bf16.mxu0 0
  %181 = vmatpush1.bf16.msra.mxu0 0
  %182 = vmatprep.subr.bf16.mxu0 0
  %183 = vmatpush1.bf16.msra.mxu0 0
  %184 = vmatprep.subr.bf16.mxu0 0
  %185 = vmatpush1.bf16.msra.mxu0 0
  %186 = vmatprep.subr.bf16.mxu0 0
  %187 = vmatpush1.bf16.msra.mxu0 0
  %188 = vmatprep.subr.bf16.mxu0 0
  %189 = vmatpush1.bf16.msra.mxu0 0
  %190 = vmatprep.subr.bf16.mxu0 0
  %191 = vmatpush1.bf16.msra.mxu0 0
  %192 = vmatprep.subr.bf16.mxu0 0
  %193 = vmatpush1.bf16.msra.mxu0 0
  %194 = vmatprep.subr.bf16.mxu0 0
  %195 = vmatpush1.bf16.msra.mxu0 0
  %196 = vmatprep.subr.bf16.mxu0 0
  %197 = vmatpush1.bf16.msra.mxu0 0
  %198 = vmatprep.subr.bf16.mxu0 0
  %199 = vmatpush1.bf16.msra.mxu0 0
  %200 = vmatprep.subr.bf16.mxu0 0
  %201 = vmatpush1.bf16.msra.mxu0 0
  %202 = vmatprep.subr.bf16.mxu0 0
  %203 = vmatpush1.bf16.msra.mxu0 0
  %204 = vmatprep.subr.bf16.mxu0 0
  %205 = vmatpush1.bf16.msra.mxu0 0
  %206 = vmatprep.mubr.bf16.mxu0 0
  %207 = vmatmul.mubr.bf16.gmra.mrb[0].mxu0 %v172
  %v208 = vpop.f32.mrb[0].mxu0
  %v209 = vadd.f32 %v169, %v208
  %v210 = vpop.f32.mrb[0].mxu0
  %v211 = vpop.f32.mrb[0].mxu0
  %v212 = vpop.f32.mrb[0].mxu0
  %213 = vdwg.mxu0
  %v214 = vld [vmem:[%s1] sm:$0xff]
  %v215 = vld [vmem:[%s1 + $0x8] sm:$0x3f]
  %v216 = vpack.c.bf16 %v215, %v214
  %v218 = vsel %vm62, %v216, 0
  %220 = vmatprep.subr.bf16.mxu0 0
  %221 = vmatpush1.bf16.msra.mxu0 %v161
  %222 = vmatprep.subr.bf16.mxu0 0
  %223 = vmatpush1.bf16.msra.mxu0 %v162
  %224 = vmatprep.subr.bf16.mxu0 0
  %225 = vmatpush1.bf16.msra.mxu0 0
  %226 = vmatprep.subr.bf16.mxu0 0
  %227 = vmatpush1.bf16.msra.mxu0 0
  %228 = vmatprep.subr.bf16.mxu0 0
  %229 = vmatpush1.bf16.msra.mxu0 0
  %230 = vmatprep.subr.bf16.mxu0 0
  %231 = vmatpush1.bf16.msra.mxu0 0
  %232 = vmatprep.subr.bf16.mxu0 0
  %233 = vmatpush1.bf16.msra.mxu0 0
  %234 = vmatprep.subr.bf16.mxu0 0
  %235 = vmatpush1.bf16.msra.mxu0 0
  %236 = vmatprep.subr.bf16.mxu0 0
  %237 = vmatpush1.bf16.msra.mxu0 0
  %238 = vmatprep.subr.bf16.mxu0 0
  %239 = vmatpush1.bf16.msra.mxu0 0
  %240 = vmatprep.subr.bf16.mxu0 0
  %241 = vmatpush1.bf16.msra.mxu0 0
  %242 = vmatprep.subr.bf16.mxu0 0
  %243 = vmatpush1.bf16.msra.mxu0 0
  %244 = vmatprep.subr.bf16.mxu0 0
  %245 = vmatpush1.bf16.msra.mxu0 0
  %246 = vmatprep.subr.bf16.mxu0 0
  %247 = vmatpush1.bf16.msra.mxu0 0
  %248 = vmatprep.subr.bf16.mxu0 0
  %249 = vmatpush1.bf16.msra.mxu0 0
  %250 = vmatprep.subr.bf16.mxu0 0
  %251 = vmatpush1.bf16.msra.mxu0 0
  %252 = vmatprep.mubr.bf16.mxu0 0
  %253 = vmatmul.mubr.bf16.gmra.mrb[0].mxu0 %v218
  %v254 = vpop.f32.mrb[0].mxu0
  %v255 = vadd.f32 %v169, %v254
  %v256 = vpop.f32.mrb[0].mxu0
  %v257 = vpop.f32.mrb[0].mxu0
  %v258 = vadd.f32 %v169, %v257
  %v259 = vpop.f32.mrb[0].mxu0
  %260 = vdwg.mxu0
  %v261 = vld [vmem:[%s6] sm:$0xff]
  %v262 = vld [vmem:[%s6 + $0x8] sm:$0xff]
  %v263 = vld [vmem:[%s6 + $0x10] sm:$0xff]
  %v264 = vld [vmem:[%s6 + $0x18] sm:$0xff]
  %v265 = vpack.c.bf16 %v262, %v261
  %v266 = vpack.c.bf16 %v264, %v263
  %v267 = vld [vmem:[%s8] sm:$0xff]
  %v268 = vld [vmem:[%s8 + $0x8] sm:$0xff]
  %v269 = vld [vmem:[%s8 + $0x10] sm:$0xff]
  %v270 = vld [vmem:[%s8 + $0x18] sm:$0xff]
  %v271 = vpack.c.bf16 %v268, %v267
  %v272 = vpack.c.bf16 %v270, %v269
  %v273 = vld [vmem:[%s9] sm:$0x1]
  %v275 = vlaneseq
  %v276 = vshrl.u32 %v275, 7
  %v277 = vsub.s32 0, %v276
  %v278 = vrot.slane %v273, %v277
  %v281 = vsel %vm62, 0, 0
  %283 = vmatprep.subr.bf16.mxu0 0
  %284 = vmatpush1.bf16.msra.mxu0 %v265
  %285 = vmatprep.subr.bf16.mxu0 0
  %286 = vmatpush1.bf16.msra.mxu0 %v266
  %287 = vmatprep.subr.bf16.mxu0 0
  %288 = vmatpush1.bf16.msra.mxu0 0
  %289 = vmatprep.subr.bf16.mxu0 0
  %290 = vmatpush1.bf16.msra.mxu0 0
  %291 = vmatprep.subr.bf16.mxu0 0
  %292 = vmatpush1.bf16.msra.mxu0 0
  %293 = vmatprep.subr.bf16.mxu0 0
  %294 = vmatpush1.bf16.msra.mxu0 0
  %295 = vmatprep.subr.bf16.mxu0 0
  %296 = vmatpush1.bf16.msra.mxu0 0
  %297 = vmatprep.subr.bf16.mxu0 0
  %298 = vmatpush1.bf16.msra.mxu0 0
  %299 = vmatprep.subr.bf16.mxu0 0
  %300 = vmatpush1.bf16.msra.mxu0 0
  %301 = vmatprep.subr.bf16.mxu0 0
  %302 = vmatpush1.bf16.msra.mxu0 0
  %303 = vmatprep.subr.bf16.mxu0 0
  %304 = vmatpush1.bf16.msra.mxu0 0
  %305 = vmatprep.subr.bf16.mxu0 0
  %306 = vmatpush1.bf16.msra.mxu0 0
  %307 = vmatprep.subr.bf16.mxu0 0
  %308 = vmatpush1.bf16.msra.mxu0 0
  %309 = vmatprep.subr.bf16.mxu0 0
  %310 = vmatpush1.bf16.msra.mxu0 0
  %311 = vmatprep.subr.bf16.mxu0 0
  %312 = vmatpush1.bf16.msra.mxu0 0
  %313 = vmatprep.subr.bf16.mxu0 0
  %314 = vmatpush1.bf16.msra.mxu0 0
  %315 = vmatprep.mubr.bf16.mxu0 0
  %316 = vmatmul.mubr.bf16.gmra.mrb[0].mxu0 %v281
  %v317 = vpop.f32.mrb[0].mxu0
  %v318 = vadd.f32 0.0, %v317
  %v319 = vpop.f32.mrb[0].mxu0
  %v320 = vpop.f32.mrb[0].mxu0
  %v321 = vpop.f32.mrb[0].mxu0
  %322 = vdwg.mxu0
  %v323 = vadd.f32 %v209, %v318
  %v324 = vxor.u32 %v323, 2147483648
  %v325 = vmul.f32 %v324, 1.442695
  %v326 = vpow.pop %v325
  %v327 = vadd.f32 %v326, 1.0
  %v328 = vrcp.pop %v327
  %v329 = vmul.f32 1.0, %v328
  %v330 = vtanh.pop %v323
  %v331 = vmul.f32 %v329, 0.0
  %333 = vrot.lane.b32.xlu0 %v330, 64
  %v334 = vpop.permute.xlu0 %333
  %v336 = vmul.f32 %v329, %v334
  %338 = vrot.lane.b32.xlu0 %v336, 32
  %v339 = vpop.permute.xlu0 %338
  %v341 = vadd.f32 %v331, %v339
  %v342 = vtanh.pop %v341
  %344 = vrot.lane.b32.xlu0 %v342, 64
  %v345 = vpop.permute.xlu0 %344
  %v347 = vmul.f32 %v329, %v345
  %v348 = vpack.c.bf16 %v347, %v347
  %350 = vrot.lane.b32.xlu0 %v348, 32
  %v351 = vpop.permute.xlu0 %350
  %v353 = vsel %vm62, %v351, 0
  %355 = vmatprep.subr.bf16.mxu0 0
  %356 = vmatpush1.bf16.msra.mxu0 %v271
  %357 = vmatprep.subr.bf16.mxu0 0
  %358 = vmatpush1.bf16.msra.mxu0 %v272
  %359 = vmatprep.subr.bf16.mxu0 0
  %360 = vmatpush1.bf16.msra.mxu0 0
  %361 = vmatprep.subr.bf16.mxu0 0
  %362 = vmatpush1.bf16.msra.mxu0 0
  %363 = vmatprep.subr.bf16.mxu0 0
  %364 = vmatpush1.bf16.msra.mxu0 0
  %365 = vmatprep.subr.bf16.mxu0 0
  %366 = vmatpush1.bf16.msra.mxu0 0
  %367 = vmatprep.subr.bf16.mxu0 0
  %368 = vmatpush1.bf16.msra.mxu0 0
  %369 = vmatprep.subr.bf16.mxu0 0
  %370 = vmatpush1.bf16.msra.mxu0 0
  %371 = vmatprep.subr.bf16.mxu0 0
  %372 = vmatpush1.bf16.msra.mxu0 0
  %373 = vmatprep.subr.bf16.mxu0 0
  %374 = vmatpush1.bf16.msra.mxu0 0
  %375 = vmatprep.subr.bf16.mxu0 0
  %376 = vmatpush1.bf16.msra.mxu0 0
  %377 = vmatprep.subr.bf16.mxu0 0
  %378 = vmatpush1.bf16.msra.mxu0 0
  %379 = vmatprep.subr.bf16.mxu0 0
  %380 = vmatpush1.bf16.msra.mxu0 0
  %381 = vmatprep.subr.bf16.mxu0 0
  %382 = vmatpush1.bf16.msra.mxu0 0
  %383 = vmatprep.subr.bf16.mxu0 0
  %384 = vmatpush1.bf16.msra.mxu0 0
  %385 = vmatprep.subr.bf16.mxu0 0
  %386 = vmatpush1.bf16.msra.mxu0 0
  %387 = vmatprep.mubr.bf16.mxu0 0
  %388 = vmatmul.mubr.bf16.gmra.mrb[0].mxu0 %v353
  %v389 = vpop.f32.mrb[0].mxu0
  %v390 = vadd.f32 %v278, %v389
  %v391 = vpop.f32.mrb[0].mxu0
  %v392 = vpop.f32.mrb[0].mxu0
  %v393 = vpop.f32.mrb[0].mxu0
  %394 = vdwg.mxu0
  %vm395 = vcmask 517120
  %396 = vst.msk [vmem:[%s10] sm:$0x3] %vm395, %v390
  %397 = vmatprep.subr.bf16.mxu0 0
  %398 = vmatpush1.bf16.msra.mxu0 %v265
  %399 = vmatprep.subr.bf16.mxu0 0
  %400 = vmatpush1.bf16.msra.mxu0 %v266
  %401 = vmatprep.subr.bf16.mxu0 0
  %402 = vmatpush1.bf16.msra.mxu0 0
  %403 = vmatprep.subr.bf16.mxu0 0
  %404 = vmatpush1.bf16.msra.mxu0 0
  %405 = vmatprep.subr.bf16.mxu0 0
  %406 = vmatpush1.bf16.msra.mxu0 0
  %407 = vmatprep.subr.bf16.mxu0 0
  %408 = vmatpush1.bf16.msra.mxu0 0
  %409 = vmatprep.subr.bf16.mxu0 0
  %410 = vmatpush1.bf16.msra.mxu0 0
  %411 = vmatprep.subr.bf16.mxu0 0
  %412 = vmatpush1.bf16.msra.mxu0 0
  %413 = vmatprep.subr.bf16.mxu0 0
  %414 = vmatpush1.bf16.msra.mxu0 0
  %415 = vmatprep.subr.bf16.mxu0 0
  %416 = vmatpush1.bf16.msra.mxu0 0
  %417 = vmatprep.subr.bf16.mxu0 0
  %418 = vmatpush1.bf16.msra.mxu0 0
  %419 = vmatprep.subr.bf16.mxu0 0
  %420 = vmatpush1.bf16.msra.mxu0 0
  %421 = vmatprep.subr.bf16.mxu0 0
  %422 = vmatpush1.bf16.msra.mxu0 0
  %423 = vmatprep.subr.bf16.mxu0 0
  %424 = vmatpush1.bf16.msra.mxu0 0
  %425 = vmatprep.subr.bf16.mxu0 0
  %426 = vmatpush1.bf16.msra.mxu0 0
  %427 = vmatprep.subr.bf16.mxu0 0
  %428 = vmatpush1.bf16.msra.mxu0 0
  %429 = vmatprep.mubr.bf16.mxu0 0
  %430 = vmatmul.mubr.bf16.gmra.mrb[0].mxu0 %v353
  %v431 = vpop.f32.mrb[0].mxu0
  %v432 = vadd.f32 0.0, %v431
  %v433 = vpop.f32.mrb[0].mxu0
  %v434 = vpop.f32.mrb[0].mxu0
  %v435 = vpop.f32.mrb[0].mxu0
  %436 = vdwg.mxu0
  %v437 = vadd.f32 %v255, %v432
  %v438 = vxor.u32 %v437, 2147483648
  %v439 = vmul.f32 %v438, 1.442695
  %v440 = vpow.pop %v439
  %v441 = vadd.f32 %v440, 1.0
  %v442 = vrcp.pop %v441
  %v443 = vmul.f32 1.0, %v442
  %v444 = vtanh.pop %v437
  %v445 = vmul.f32 %v443, %v341
  %447 = vrot.lane.b32.xlu0 %v444, 64
  %v448 = vpop.permute.xlu0 %447
  %v450 = vmul.f32 %v443, %v448
  %452 = vrot.lane.b32.xlu0 %v450, 32
  %v453 = vpop.permute.xlu0 %452
  %v455 = vadd.f32 %v445, %v453
  %v456 = vtanh.pop %v455
  %458 = vrot.lane.b32.xlu0 %v456, 64
  %v459 = vpop.permute.xlu0 %458
  %v461 = vmul.f32 %v443, %v459
  %v462 = vpack.c.bf16 %v461, %v461
  %464 = vrot.lane.b32.xlu0 %v462, 32
  %v465 = vpop.permute.xlu0 %464
  %v467 = vsel %vm62, %v465, 0
  %469 = vmatprep.subr.bf16.mxu0 0
  %470 = vmatpush1.bf16.msra.mxu0 %v271
  %471 = vmatprep.subr.bf16.mxu0 0
  %472 = vmatpush1.bf16.msra.mxu0 %v272
  %473 = vmatprep.subr.bf16.mxu0 0
  %474 = vmatpush1.bf16.msra.mxu0 0
  %475 = vmatprep.subr.bf16.mxu0 0
  %476 = vmatpush1.bf16.msra.mxu0 0
  %477 = vmatprep.subr.bf16.mxu0 0
  %478 = vmatpush1.bf16.msra.mxu0 0
  %479 = vmatprep.subr.bf16.mxu0 0
  %480 = vmatpush1.bf16.msra.mxu0 0
  %481 = vmatprep.subr.bf16.mxu0 0
  %482 = vmatpush1.bf16.msra.mxu0 0
  %483 = vmatprep.subr.bf16.mxu0 0
  %484 = vmatpush1.bf16.msra.mxu0 0
  %485 = vmatprep.subr.bf16.mxu0 0
  %486 = vmatpush1.bf16.msra.mxu0 0
  %487 = vmatprep.subr.bf16.mxu0 0
  %488 = vmatpush1.bf16.msra.mxu0 0
  %489 = vmatprep.subr.bf16.mxu0 0
  %490 = vmatpush1.bf16.msra.mxu0 0
  %491 = vmatprep.subr.bf16.mxu0 0
  %492 = vmatpush1.bf16.msra.mxu0 0
  %493 = vmatprep.subr.bf16.mxu0 0
  %494 = vmatpush1.bf16.msra.mxu0 0
  %495 = vmatprep.subr.bf16.mxu0 0
  %496 = vmatpush1.bf16.msra.mxu0 0
  %497 = vmatprep.subr.bf16.mxu0 0
  %498 = vmatpush1.bf16.msra.mxu0 0
  %499 = vmatprep.subr.bf16.mxu0 0
  %500 = vmatpush1.bf16.msra.mxu0 0
  %501 = vmatprep.mubr.bf16.mxu0 0
  %502 = vmatmul.mubr.bf16.gmra.mrb[0].mxu0 %v467
  %v503 = vpop.f32.mrb[0].mxu0
  %v504 = vadd.f32 %v278, %v503
  %v505 = vpop.f32.mrb[0].mxu0
  %v506 = vpop.f32.mrb[0].mxu0
  %v507 = vpop.f32.mrb[0].mxu0
  %508 = vdwg.mxu0
  %s509 = scalar_lea.vmem %s10, 2
  %510 = vst.msk [vmem:[%s509] sm:$0x3] %vm395, %v504
  %511 = vmatprep.subr.bf16.mxu0 0
  %512 = vmatpush1.bf16.msra.mxu0 %v265
  %513 = vmatprep.subr.bf16.mxu0 0
  %514 = vmatpush1.bf16.msra.mxu0 %v266
  %515 = vmatprep.subr.bf16.mxu0 0
  %516 = vmatpush1.bf16.msra.mxu0 0
  %517 = vmatprep.subr.bf16.mxu0 0
  %518 = vmatpush1.bf16.msra.mxu0 0
  %519 = vmatprep.subr.bf16.mxu0 0
  %520 = vmatpush1.bf16.msra.mxu0 0
  %521 = vmatprep.subr.bf16.mxu0 0
  %522 = vmatpush1.bf16.msra.mxu0 0
  %523 = vmatprep.subr.bf16.mxu0 0
  %524 = vmatpush1.bf16.msra.mxu0 0
  %525 = vmatprep.subr.bf16.mxu0 0
  %526 = vmatpush1.bf16.msra.mxu0 0
  %527 = vmatprep.subr.bf16.mxu0 0
  %528 = vmatpush1.bf16.msra.mxu0 0
  %529 = vmatprep.subr.bf16.mxu0 0
  %530 = vmatpush1.bf16.msra.mxu0 0
  %531 = vmatprep.subr.bf16.mxu0 0
  %532 = vmatpush1.bf16.msra.mxu0 0
  %533 = vmatprep.subr.bf16.mxu0 0
  %534 = vmatpush1.bf16.msra.mxu0 0
  %535 = vmatprep.subr.bf16.mxu0 0
  %536 = vmatpush1.bf16.msra.mxu0 0
  %537 = vmatprep.subr.bf16.mxu0 0
  %538 = vmatpush1.bf16.msra.mxu0 0
  %539 = vmatprep.subr.bf16.mxu0 0
  %540 = vmatpush1.bf16.msra.mxu0 0
  %541 = vmatprep.subr.bf16.mxu0 0
  %542 = vmatpush1.bf16.msra.mxu0 0
  %543 = vmatprep.mubr.bf16.mxu0 0
  %544 = vmatmul.mubr.bf16.gmra.mrb[0].mxu0 %v467
  %v545 = vpop.f32.mrb[0].mxu0
  %v546 = vadd.f32 0.0, %v545
  %v547 = vpop.f32.mrb[0].mxu0
  %v548 = vpop.f32.mrb[0].mxu0
  %v549 = vpop.f32.mrb[0].mxu0
  %550 = vdwg.mxu0
  %v552 = vrot.slane %v546, 6
  %v554 = vadd.f32 %v255, %v552
  %v555 = vxor.u32 %v554, 2147483648
  %v556 = vmul.f32 %v555, 1.442695
  %v557 = vpow.pop %v556
  %v558 = vadd.f32 %v557, 1.0
  %v559 = vrcp.pop %v558
  %v560 = vmul.f32 1.0, %v559
  %v561 = vtanh.pop %v554
  %v563 = vrot.slane %v455, 6
  %v565 = vmul.f32 %v560, %v563
  %567 = vrot.lane.b32.xlu0 %v561, 64
  %v568 = vpop.permute.xlu0 %567
  %v570 = vmul.f32 %v560, %v568
  %572 = vrot.lane.b32.xlu0 %v570, 32
  %v573 = vpop.permute.xlu0 %572
  %v575 = vadd.f32 %v565, %v573
  %v576 = vtanh.pop %v575
  %578 = vrot.lane.b32.xlu0 %v576, 64
  %v579 = vpop.permute.xlu0 %578
  %v581 = vmul.f32 %v560, %v579
  %v582 = vpack.c.bf16 %v581, %v581
  %v584 = vrot.slane %v582, 1
  %585 = vrot.lane.b32.xlu0 %v584, 32
  %v586 = vpop.permute.xlu0 %585
  %v588 = vsel %vm62, %v586, 0
  %590 = vmatprep.subr.bf16.mxu0 0
  %591 = vmatpush1.bf16.msra.mxu0 %v271
  %592 = vmatprep.subr.bf16.mxu0 0
  %593 = vmatpush1.bf16.msra.mxu0 %v272
  %594 = vmatprep.subr.bf16.mxu0 0
  %595 = vmatpush1.bf16.msra.mxu0 0
  %596 = vmatprep.subr.bf16.mxu0 0
  %597 = vmatpush1.bf16.msra.mxu0 0
  %598 = vmatprep.subr.bf16.mxu0 0
  %599 = vmatpush1.bf16.msra.mxu0 0
  %600 = vmatprep.subr.bf16.mxu0 0
  %601 = vmatpush1.bf16.msra.mxu0 0
  %602 = vmatprep.subr.bf16.mxu0 0
  %603 = vmatpush1.bf16.msra.mxu0 0
  %604 = vmatprep.subr.bf16.mxu0 0
  %605 = vmatpush1.bf16.msra.mxu0 0
  %606 = vmatprep.subr.bf16.mxu0 0
  %607 = vmatpush1.bf16.msra.mxu0 0
  %608 = vmatprep.subr.bf16.mxu0 0
  %609 = vmatpush1.bf16.msra.mxu0 0
  %610 = vmatprep.subr.bf16.mxu0 0
  %611 = vmatpush1.bf16.msra.mxu0 0
  %612 = vmatprep.subr.bf16.mxu0 0
  %613 = vmatpush1.bf16.msra.mxu0 0
  %614 = vmatprep.subr.bf16.mxu0 0
  %615 = vmatpush1.bf16.msra.mxu0 0
  %616 = vmatprep.subr.bf16.mxu0 0
  %617 = vmatpush1.bf16.msra.mxu0 0
  %618 = vmatprep.subr.bf16.mxu0 0
  %619 = vmatpush1.bf16.msra.mxu0 0
  %620 = vmatprep.subr.bf16.mxu0 0
  %621 = vmatpush1.bf16.msra.mxu0 0
  %622 = vmatprep.mubr.bf16.mxu0 0
  %623 = vmatmul.mubr.bf16.gmra.mrb[0].mxu0 %v588
  %v624 = vpop.f32.mrb[0].mxu0
  %v625 = vadd.f32 %v278, %v624
  %v626 = vpop.f32.mrb[0].mxu0
  %v627 = vpop.f32.mrb[0].mxu0
  %v628 = vpop.f32.mrb[0].mxu0
  %629 = vdwg.mxu0
  %s630 = scalar_lea.vmem %s10, 4
  %631 = vst.msk [vmem:[%s630] sm:$0x3] %vm395, %v625
  %632 = vmatprep.subr.bf16.mxu0 0
  %633 = vmatpush1.bf16.msra.mxu0 %v265
  %634 = vmatprep.subr.bf16.mxu0 0
  %635 = vmatpush1.bf16.msra.mxu0 %v266
  %636 = vmatprep.subr.bf16.mxu0 0
  %637 = vmatpush1.bf16.msra.mxu0 0
  %638 = vmatprep.subr.bf16.mxu0 0
  %639 = vmatpush1.bf16.msra.mxu0 0
  %640 = vmatprep.subr.bf16.mxu0 0
  %641 = vmatpush1.bf16.msra.mxu0 0
  %642 = vmatprep.subr.bf16.mxu0 0
  %643 = vmatpush1.bf16.msra.mxu0 0
  %644 = vmatprep.subr.bf16.mxu0 0
  %645 = vmatpush1.bf16.msra.mxu0 0
  %646 = vmatprep.subr.bf16.mxu0 0
  %647 = vmatpush1.bf16.msra.mxu0 0
  %648 = vmatprep.subr.bf16.mxu0 0
  %649 = vmatpush1.bf16.msra.mxu0 0
  %650 = vmatprep.subr.bf16.mxu0 0
  %651 = vmatpush1.bf16.msra.mxu0 0
  %652 = vmatprep.subr.bf16.mxu0 0
  %653 = vmatpush1.bf16.msra.mxu0 0
  %654 = vmatprep.subr.bf16.mxu0 0
  %655 = vmatpush1.bf16.msra.mxu0 0
  %656 = vmatprep.subr.bf16.mxu0 0
  %657 = vmatpush1.bf16.msra.mxu0 0
  %658 = vmatprep.subr.bf16.mxu0 0
  %659 = vmatpush1.bf16.msra.mxu0 0
  %660 = vmatprep.subr.bf16.mxu0 0
  %661 = vmatpush1.bf16.msra.mxu0 0
  %662 = vmatprep.subr.bf16.mxu0 0
  %663 = vmatpush1.bf16.msra.mxu0 0
  %664 = vmatprep.mubr.bf16.mxu0 0
  %665 = vmatmul.mubr.bf16.gmra.mrb[0].mxu0 %v588
  %v666 = vpop.f32.mrb[0].mxu0
  %v667 = vadd.f32 0.0, %v666
  %v668 = vpop.f32.mrb[0].mxu0
  %v669 = vpop.f32.mrb[0].mxu0
  %v670 = vpop.f32.mrb[0].mxu0
  %671 = vdwg.mxu0
  %v673 = vrot.slane %v667, 4
  %v675 = vadd.f32 %v255, %v673
  %v676 = vxor.u32 %v675, 2147483648
  %v677 = vmul.f32 %v676, 1.442695
  %v678 = vpow.pop %v677
  %v679 = vadd.f32 %v678, 1.0
  %v680 = vrcp.pop %v679
  %v681 = vmul.f32 1.0, %v680
  %v682 = vtanh.pop %v675
  %v684 = vrot.slane %v575, 6
  %v686 = vmul.f32 %v681, %v684
  %688 = vrot.lane.b32.xlu0 %v682, 64
  %v689 = vpop.permute.xlu0 %688
  %v691 = vmul.f32 %v681, %v689
  %693 = vrot.lane.b32.xlu0 %v691, 32
  %v694 = vpop.permute.xlu0 %693
  %v696 = vadd.f32 %v686, %v694
  %v697 = vtanh.pop %v696
  %699 = vrot.lane.b32.xlu0 %v697, 64
  %v700 = vpop.permute.xlu0 %699
  %v702 = vmul.f32 %v681, %v700
  %v703 = vpack.c.bf16 %v702, %v702
  %v705 = vrot.slane %v703, 2
  %706 = vrot.lane.b32.xlu0 %v705, 32
  %v707 = vpop.permute.xlu0 %706
  %v709 = vsel %vm62, %v707, 0
  %711 = vmatprep.subr.bf16.mxu0 0
  %712 = vmatpush1.bf16.msra.mxu0 %v271
  %713 = vmatprep.subr.bf16.mxu0 0
  %714 = vmatpush1.bf16.msra.mxu0 %v272
  %715 = vmatprep.subr.bf16.mxu0 0
  %716 = vmatpush1.bf16.msra.mxu0 0
  %717 = vmatprep.subr.bf16.mxu0 0
  %718 = vmatpush1.bf16.msra.mxu0 0
  %719 = vmatprep.subr.bf16.mxu0 0
  %720 = vmatpush1.bf16.msra.mxu0 0
  %721 = vmatprep.subr.bf16.mxu0 0
  %722 = vmatpush1.bf16.msra.mxu0 0
  %723 = vmatprep.subr.bf16.mxu0 0
  %724 = vmatpush1.bf16.msra.mxu0 0
  %725 = vmatprep.subr.bf16.mxu0 0
  %726 = vmatpush1.bf16.msra.mxu0 0
  %727 = vmatprep.subr.bf16.mxu0 0
  %728 = vmatpush1.bf16.msra.mxu0 0
  %729 = vmatprep.subr.bf16.mxu0 0
  %730 = vmatpush1.bf16.msra.mxu0 0
  %731 = vmatprep.subr.bf16.mxu0 0
  %732 = vmatpush1.bf16.msra.mxu0 0
  %733 = vmatprep.subr.bf16.mxu0 0
  %734 = vmatpush1.bf16.msra.mxu0 0
  %735 = vmatprep.subr.bf16.mxu0 0
  %736 = vmatpush1.bf16.msra.mxu0 0
  %737 = vmatprep.subr.bf16.mxu0 0
  %738 = vmatpush1.bf16.msra.mxu0 0
  %739 = vmatprep.subr.bf16.mxu0 0
  %740 = vmatpush1.bf16.msra.mxu0 0
  %741 = vmatprep.subr.bf16.mxu0 0
  %742 = vmatpush1.bf16.msra.mxu0 0
  %743 = vmatprep.mubr.bf16.mxu0 0
  %744 = vmatmul.mubr.bf16.gmra.mrb[0].mxu0 %v709
  %v745 = vpop.f32.mrb[0].mxu0
  %v746 = vadd.f32 %v278, %v745
  %v747 = vpop.f32.mrb[0].mxu0
  %v748 = vpop.f32.mrb[0].mxu0
  %v749 = vpop.f32.mrb[0].mxu0
  %750 = vdwg.mxu0
  %s751 = scalar_lea.vmem %s10, 6
  %752 = vst.msk [vmem:[%s751] sm:$0x3] %vm395, %v746
  %753 = vmatprep.subr.bf16.mxu0 0
  %754 = vmatpush1.bf16.msra.mxu0 %v265
  %755 = vmatprep.subr.bf16.mxu0 0
  %756 = vmatpush1.bf16.msra.mxu0 %v266
  %757 = vmatprep.subr.bf16.mxu0 0
  %758 = vmatpush1.bf16.msra.mxu0 0
  %759 = vmatprep.subr.bf16.mxu0 0
  %760 = vmatpush1.bf16.msra.mxu0 0
  %761 = vmatprep.subr.bf16.mxu0 0
  %762 = vmatpush1.bf16.msra.mxu0 0
  %763 = vmatprep.subr.bf16.mxu0 0
  %764 = vmatpush1.bf16.msra.mxu0 0
  %765 = vmatprep.subr.bf16.mxu0 0
  %766 = vmatpush1.bf16.msra.mxu0 0
  %767 = vmatprep.subr.bf16.mxu0 0
  %768 = vmatpush1.bf16.msra.mxu0 0
  %769 = vmatprep.subr.bf16.mxu0 0
  %770 = vmatpush1.bf16.msra.mxu0 0
  %771 = vmatprep.subr.bf16.mxu0 0
  %772 = vmatpush1.bf16.msra.mxu0 0
  %773 = vmatprep.subr.bf16.mxu0 0
  %774 = vmatpush1.bf16.msra.mxu0 0
  %775 = vmatprep.subr.bf16.mxu0 0
  %776 = vmatpush1.bf16.msra.mxu0 0
  %777 = vmatprep.subr.bf16.mxu0 0
  %778 = vmatpush1.bf16.msra.mxu0 0
  %779 = vmatprep.subr.bf16.mxu0 0
  %780 = vmatpush1.bf16.msra.mxu0 0
  %781 = vmatprep.subr.bf16.mxu0 0
  %782 = vmatpush1.bf16.msra.mxu0 0
  %783 = vmatprep.subr.bf16.mxu0 0
  %784 = vmatpush1.bf16.msra.mxu0 0
  %785 = vmatprep.mubr.bf16.mxu0 0
  %786 = vmatmul.mubr.bf16.gmra.mrb[0].mxu0 %v709
  %v787 = vpop.f32.mrb[0].mxu0
  %v788 = vadd.f32 0.0, %v787
  %v789 = vpop.f32.mrb[0].mxu0
  %v790 = vpop.f32.mrb[0].mxu0
  %v791 = vpop.f32.mrb[0].mxu0
  %792 = vdwg.mxu0
  %v794 = vrot.slane %v788, 2
  %v796 = vadd.f32 %v255, %v794
  %v797 = vxor.u32 %v796, 2147483648
  %v798 = vmul.f32 %v797, 1.442695
  %v799 = vpow.pop %v798
  %v800 = vadd.f32 %v799, 1.0
  %v801 = vrcp.pop %v800
  %v802 = vmul.f32 1.0, %v801
  %v803 = vtanh.pop %v796
  %v805 = vrot.slane %v696, 6
  %v807 = vmul.f32 %v802, %v805
  %809 = vrot.lane.b32.xlu0 %v803, 64
  %v810 = vpop.permute.xlu0 %809
  %v812 = vmul.f32 %v802, %v810
  %814 = vrot.lane.b32.xlu0 %v812, 32
  %v815 = vpop.permute.xlu0 %814
  %v817 = vadd.f32 %v807, %v815
  %v818 = vtanh.pop %v817
  %820 = vrot.lane.b32.xlu0 %v818, 64
  %v821 = vpop.permute.xlu0 %820
  %v823 = vmul.f32 %v802, %v821
  %v824 = vpack.c.bf16 %v823, %v823
  %v826 = vrot.slane %v824, 3
  %827 = vrot.lane.b32.xlu0 %v826, 32
  %v828 = vpop.permute.xlu0 %827
  %v830 = vsel %vm62, %v828, 0
  %832 = vmatprep.subr.bf16.mxu0 0
  %833 = vmatpush1.bf16.msra.mxu0 %v271
  %834 = vmatprep.subr.bf16.mxu0 0
  %835 = vmatpush1.bf16.msra.mxu0 %v272
  %836 = vmatprep.subr.bf16.mxu0 0
  %837 = vmatpush1.bf16.msra.mxu0 0
  %838 = vmatprep.subr.bf16.mxu0 0
  %839 = vmatpush1.bf16.msra.mxu0 0
  %840 = vmatprep.subr.bf16.mxu0 0
  %841 = vmatpush1.bf16.msra.mxu0 0
  %842 = vmatprep.subr.bf16.mxu0 0
  %843 = vmatpush1.bf16.msra.mxu0 0
  %844 = vmatprep.subr.bf16.mxu0 0
  %845 = vmatpush1.bf16.msra.mxu0 0
  %846 = vmatprep.subr.bf16.mxu0 0
  %847 = vmatpush1.bf16.msra.mxu0 0
  %848 = vmatprep.subr.bf16.mxu0 0
  %849 = vmatpush1.bf16.msra.mxu0 0
  %850 = vmatprep.subr.bf16.mxu0 0
  %851 = vmatpush1.bf16.msra.mxu0 0
  %852 = vmatprep.subr.bf16.mxu0 0
  %853 = vmatpush1.bf16.msra.mxu0 0
  %854 = vmatprep.subr.bf16.mxu0 0
  %855 = vmatpush1.bf16.msra.mxu0 0
  %856 = vmatprep.subr.bf16.mxu0 0
  %857 = vmatpush1.bf16.msra.mxu0 0
  %858 = vmatprep.subr.bf16.mxu0 0
  %859 = vmatpush1.bf16.msra.mxu0 0
  %860 = vmatprep.subr.bf16.mxu0 0
  %861 = vmatpush1.bf16.msra.mxu0 0
  %862 = vmatprep.subr.bf16.mxu0 0
  %863 = vmatpush1.bf16.msra.mxu0 0
  %864 = vmatprep.mubr.bf16.mxu0 0
  %865 = vmatmul.mubr.bf16.gmra.mrb[0].mxu0 %v830
  %v866 = vpop.f32.mrb[0].mxu0
  %v867 = vadd.f32 %v278, %v866
  %v868 = vpop.f32.mrb[0].mxu0
  %v869 = vpop.f32.mrb[0].mxu0
  %v870 = vpop.f32.mrb[0].mxu0
  %871 = vdwg.mxu0
  %s872 = scalar_lea.vmem %s10, 8
  %873 = vst.msk [vmem:[%s872] sm:$0x3] %vm395, %v867
  %874 = vmatprep.subr.bf16.mxu0 0
  %875 = vmatpush1.bf16.msra.mxu0 %v265
  %876 = vmatprep.subr.bf16.mxu0 0
  %877 = vmatpush1.bf16.msra.mxu0 %v266
  %878 = vmatprep.subr.bf16.mxu0 0
  %879 = vmatpush1.bf16.msra.mxu0 0
  %880 = vmatprep.subr.bf16.mxu0 0
  %881 = vmatpush1.bf16.msra.mxu0 0
  %882 = vmatprep.subr.bf16.mxu0 0
  %883 = vmatpush1.bf16.msra.mxu0 0
  %884 = vmatprep.subr.bf16.mxu0 0
  %885 = vmatpush1.bf16.msra.mxu0 0
  %886 = vmatprep.subr.bf16.mxu0 0
  %887 = vmatpush1.bf16.msra.mxu0 0
  %888 = vmatprep.subr.bf16.mxu0 0
  %889 = vmatpush1.bf16.msra.mxu0 0
  %890 = vmatprep.subr.bf16.mxu0 0
  %891 = vmatpush1.bf16.msra.mxu0 0
  %892 = vmatprep.subr.bf16.mxu0 0
  %893 = vmatpush1.bf16.msra.mxu0 0
  %894 = vmatprep.subr.bf16.mxu0 0
  %895 = vmatpush1.bf16.msra.mxu0 0
  %896 = vmatprep.subr.bf16.mxu0 0
  %897 = vmatpush1.bf16.msra.mxu0 0
  %898 = vmatprep.subr.bf16.mxu0 0
  %899 = vmatpush1.bf16.msra.mxu0 0
  %900 = vmatprep.subr.bf16.mxu0 0
  %901 = vmatpush1.bf16.msra.mxu0 0
  %902 = vmatprep.subr.bf16.mxu0 0
  %903 = vmatpush1.bf16.msra.mxu0 0
  %904 = vmatprep.subr.bf16.mxu0 0
  %905 = vmatpush1.bf16.msra.mxu0 0
  %906 = vmatprep.mubr.bf16.mxu0 0
  %907 = vmatmul.mubr.bf16.gmra.mrb[0].mxu0 %v830
  %v908 = vpop.f32.mrb[0].mxu0
  %v909 = vadd.f32 0.0, %v908
  %v910 = vpop.f32.mrb[0].mxu0
  %v911 = vpop.f32.mrb[0].mxu0
  %v912 = vpop.f32.mrb[0].mxu0
  %913 = vdwg.mxu0
  %v914 = vadd.f32 %v258, %v909
  %v915 = vxor.u32 %v914, 2147483648
  %v916 = vmul.f32 %v915, 1.442695
  %v917 = vpow.pop %v916
  %v918 = vadd.f32 %v917, 1.0
  %v919 = vrcp.pop %v918
  %v920 = vmul.f32 1.0, %v919
  %v921 = vtanh.pop %v914
  %v923 = vrot.slane %v817, 6
  %v925 = vmul.f32 %v920, %v923
  %927 = vrot.lane.b32.xlu0 %v921, 64
  %v928 = vpop.permute.xlu0 %927
  %v930 = vmul.f32 %v920, %v928
  %932 = vrot.lane.b32.xlu0 %v930, 32
  %v933 = vpop.permute.xlu0 %932
  %v935 = vadd.f32 %v925, %v933
  %v936 = vtanh.pop %v935
  %938 = vrot.lane.b32.xlu0 %v936, 64
  %v939 = vpop.permute.xlu0 %938
  %v941 = vmul.f32 %v920, %v939
  %v942 = vpack.c.bf16 %v941, %v941
  %944 = vrot.lane.b32.xlu0 %v942, 32
  %v945 = vpop.permute.xlu0 %944
  %v947 = vsel %vm62, %v945, 0
  %949 = vmatprep.subr.bf16.mxu0 0
  %950 = vmatpush1.bf16.msra.mxu0 %v271
  %951 = vmatprep.subr.bf16.mxu0 0
  %952 = vmatpush1.bf16.msra.mxu0 %v272
  %953 = vmatprep.subr.bf16.mxu0 0
  %954 = vmatpush1.bf16.msra.mxu0 0
  %955 = vmatprep.subr.bf16.mxu0 0
  %956 = vmatpush1.bf16.msra.mxu0 0
  %957 = vmatprep.subr.bf16.mxu0 0
  %958 = vmatpush1.bf16.msra.mxu0 0
  %959 = vmatprep.subr.bf16.mxu0 0
  %960 = vmatpush1.bf16.msra.mxu0 0
  %961 = vmatprep.subr.bf16.mxu0 0
  %962 = vmatpush1.bf16.msra.mxu0 0
  %963 = vmatprep.subr.bf16.mxu0 0
  %964 = vmatpush1.bf16.msra.mxu0 0
  %965 = vmatprep.subr.bf16.mxu0 0
  %966 = vmatpush1.bf16.msra.mxu0 0
  %967 = vmatprep.subr.bf16.mxu0 0
  %968 = vmatpush1.bf16.msra.mxu0 0
  %969 = vmatprep.subr.bf16.mxu0 0
  %970 = vmatpush1.bf16.msra.mxu0 0
  %971 = vmatprep.subr.bf16.mxu0 0
  %972 = vmatpush1.bf16.msra.mxu0 0
  %973 = vmatprep.subr.bf16.mxu0 0
  %974 = vmatpush1.bf16.msra.mxu0 0
  %975 = vmatprep.subr.bf16.mxu0 0
  %976 = vmatpush1.bf16.msra.mxu0 0
  %977 = vmatprep.subr.bf16.mxu0 0
  %978 = vmatpush1.bf16.msra.mxu0 0
  %979 = vmatprep.subr.bf16.mxu0 0
  %980 = vmatpush1.bf16.msra.mxu0 0
  %981 = vmatprep.mubr.bf16.mxu0 0
  %982 = vmatmul.mubr.bf16.gmra.mrb[0].mxu0 %v947
  %v983 = vpop.f32.mrb[0].mxu0
  %v984 = vadd.f32 %v278, %v983
  %v985 = vpop.f32.mrb[0].mxu0
  %v986 = vpop.f32.mrb[0].mxu0
  %v987 = vpop.f32.mrb[0].mxu0
  %988 = vdwg.mxu0
  %s989 = scalar_lea.vmem %s10, 10
  %990 = vst.msk [vmem:[%s989] sm:$0x3] %vm395, %v984
  %991 = vmatprep.subr.bf16.mxu0 0
  %992 = vmatpush1.bf16.msra.mxu0 %v265
  %993 = vmatprep.subr.bf16.mxu0 0
  %994 = vmatpush1.bf16.msra.mxu0 %v266
  %995 = vmatprep.subr.bf16.mxu0 0
  %996 = vmatpush1.bf16.msra.mxu0 0
  %997 = vmatprep.subr.bf16.mxu0 0
  %998 = vmatpush1.bf16.msra.mxu0 0
  %999 = vmatprep.subr.bf16.mxu0 0
  %1000 = vmatpush1.bf16.msra.mxu0 0
  %1001 = vmatprep.subr.bf16.mxu0 0
  %1002 = vmatpush1.bf16.msra.mxu0 0
  %1003 = vmatprep.subr.bf16.mxu0 0
  %1004 = vmatpush1.bf16.msra.mxu0 0
  %1005 = vmatprep.subr.bf16.mxu0 0
  %1006 = vmatpush1.bf16.msra.mxu0 0
  %1007 = vmatprep.subr.bf16.mxu0 0
  %1008 = vmatpush1.bf16.msra.mxu0 0
  %1009 = vmatprep.subr.bf16.mxu0 0
  %1010 = vmatpush1.bf16.msra.mxu0 0
  %1011 = vmatprep.subr.bf16.mxu0 0
  %1012 = vmatpush1.bf16.msra.mxu0 0
  %1013 = vmatprep.subr.bf16.mxu0 0
  %1014 = vmatpush1.bf16.msra.mxu0 0
  %1015 = vmatprep.subr.bf16.mxu0 0
  %1016 = vmatpush1.bf16.msra.mxu0 0
  %1017 = vmatprep.subr.bf16.mxu0 0
  %1018 = vmatpush1.bf16.msra.mxu0 0
  %1019 = vmatprep.subr.bf16.mxu0 0
  %1020 = vmatpush1.bf16.msra.mxu0 0
  %1021 = vmatprep.subr.bf16.mxu0 0
  %1022 = vmatpush1.bf16.msra.mxu0 0
  %1023 = vmatprep.mubr.bf16.mxu0 0
  %1024 = vmatmul.mubr.bf16.gmra.mrb[0].mxu0 %v947
  %v1025 = vpop.f32.mrb[0].mxu0
  %v1026 = vadd.f32 0.0, %v1025
  %v1027 = vpop.f32.mrb[0].mxu0
  %v1028 = vpop.f32.mrb[0].mxu0
  %v1029 = vpop.f32.mrb[0].mxu0
  %1030 = vdwg.mxu0
  %v1032 = vrot.slane %v1026, 6
  %v1034 = vadd.f32 %v258, %v1032
  %v1035 = vxor.u32 %v1034, 2147483648
  %v1036 = vmul.f32 %v1035, 1.442695
  %v1037 = vpow.pop %v1036
  %v1038 = vadd.f32 %v1037, 1.0
  %v1039 = vrcp.pop %v1038
  %v1040 = vmul.f32 1.0, %v1039
  %v1041 = vtanh.pop %v1034
  %v1043 = vrot.slane %v935, 6
  %v1045 = vmul.f32 %v1040, %v1043
  %1047 = vrot.lane.b32.xlu0 %v1041, 64
  %v1048 = vpop.permute.xlu0 %1047
  %v1050 = vmul.f32 %v1040, %v1048
  %1052 = vrot.lane.b32.xlu0 %v1050, 32
  %v1053 = vpop.permute.xlu0 %1052
  %v1055 = vadd.f32 %v1045, %v1053
  %v1056 = vtanh.pop %v1055
  %1058 = vrot.lane.b32.xlu0 %v1056, 64
  %v1059 = vpop.permute.xlu0 %1058
  %v1061 = vmul.f32 %v1040, %v1059
  %v1062 = vpack.c.bf16 %v1061, %v1061
  %v1064 = vrot.slane %v1062, 1
  %1065 = vrot.lane.b32.xlu0 %v1064, 32
  %v1066 = vpop.permute.xlu0 %1065
  %v1068 = vsel %vm62, %v1066, 0
  %1070 = vmatprep.subr.bf16.mxu0 0
  %1071 = vmatpush1.bf16.msra.mxu0 %v271
  %1072 = vmatprep.subr.bf16.mxu0 0
  %1073 = vmatpush1.bf16.msra.mxu0 %v272
  %1074 = vmatprep.subr.bf16.mxu0 0
  %1075 = vmatpush1.bf16.msra.mxu0 0
  %1076 = vmatprep.subr.bf16.mxu0 0
  %1077 = vmatpush1.bf16.msra.mxu0 0
  %1078 = vmatprep.subr.bf16.mxu0 0
  %1079 = vmatpush1.bf16.msra.mxu0 0
  %1080 = vmatprep.subr.bf16.mxu0 0
  %1081 = vmatpush1.bf16.msra.mxu0 0
  %1082 = vmatprep.subr.bf16.mxu0 0
  %1083 = vmatpush1.bf16.msra.mxu0 0
  %1084 = vmatprep.subr.bf16.mxu0 0
  %1085 = vmatpush1.bf16.msra.mxu0 0
  %1086 = vmatprep.subr.bf16.mxu0 0
  %1087 = vmatpush1.bf16.msra.mxu0 0
  %1088 = vmatprep.subr.bf16.mxu0 0
  %1089 = vmatpush1.bf16.msra.mxu0 0
  %1090 = vmatprep.subr.bf16.mxu0 0
  %1091 = vmatpush1.bf16.msra.mxu0 0
  %1092 = vmatprep.subr.bf16.mxu0 0
  %1093 = vmatpush1.bf16.msra.mxu0 0
  %1094 = vmatprep.subr.bf16.mxu0 0
  %1095 = vmatpush1.bf16.msra.mxu0 0
  %1096 = vmatprep.subr.bf16.mxu0 0
  %1097 = vmatpush1.bf16.msra.mxu0 0
  %1098 = vmatprep.subr.bf16.mxu0 0
  %1099 = vmatpush1.bf16.msra.mxu0 0
  %1100 = vmatprep.subr.bf16.mxu0 0
  %1101 = vmatpush1.bf16.msra.mxu0 0
  %1102 = vmatprep.mubr.bf16.mxu0 0
  %1103 = vmatmul.mubr.bf16.gmra.mrb[0].mxu0 %v1068
  %v1104 = vpop.f32.mrb[0].mxu0
  %v1105 = vadd.f32 %v278, %v1104
  %v1106 = vpop.f32.mrb[0].mxu0
  %v1107 = vpop.f32.mrb[0].mxu0
  %v1108 = vpop.f32.mrb[0].mxu0
  %1109 = vdwg.mxu0
  %s1110 = scalar_lea.vmem %s10, 12
  %1111 = vst.msk [vmem:[%s1110] sm:$0x3] %vm395, %v1105
  %1112 = vmatprep.subr.bf16.mxu0 0
  %1113 = vmatpush1.bf16.msra.mxu0 %v265
  %1114 = vmatprep.subr.bf16.mxu0 0
  %1115 = vmatpush1.bf16.msra.mxu0 %v266
  %1116 = vmatprep.subr.bf16.mxu0 0
  %1117 = vmatpush1.bf16.msra.mxu0 0
  %1118 = vmatprep.subr.bf16.mxu0 0
  %1119 = vmatpush1.bf16.msra.mxu0 0
  %1120 = vmatprep.subr.bf16.mxu0 0
  %1121 = vmatpush1.bf16.msra.mxu0 0
  %1122 = vmatprep.subr.bf16.mxu0 0
  %1123 = vmatpush1.bf16.msra.mxu0 0
  %1124 = vmatprep.subr.bf16.mxu0 0
  %1125 = vmatpush1.bf16.msra.mxu0 0
  %1126 = vmatprep.subr.bf16.mxu0 0
  %1127 = vmatpush1.bf16.msra.mxu0 0
  %1128 = vmatprep.subr.bf16.mxu0 0
  %1129 = vmatpush1.bf16.msra.mxu0 0
  %1130 = vmatprep.subr.bf16.mxu0 0
  %1131 = vmatpush1.bf16.msra.mxu0 0
  %1132 = vmatprep.subr.bf16.mxu0 0
  %1133 = vmatpush1.bf16.msra.mxu0 0
  %1134 = vmatprep.subr.bf16.mxu0 0
  %1135 = vmatpush1.bf16.msra.mxu0 0
  %1136 = vmatprep.subr.bf16.mxu0 0
  %1137 = vmatpush1.bf16.msra.mxu0 0
  %1138 = vmatprep.subr.bf16.mxu0 0
  %1139 = vmatpush1.bf16.msra.mxu0 0
  %1140 = vmatprep.subr.bf16.mxu0 0
  %1141 = vmatpush1.bf16.msra.mxu0 0
  %1142 = vmatprep.subr.bf16.mxu0 0
  %1143 = vmatpush1.bf16.msra.mxu0 0
  %1144 = vmatprep.mubr.bf16.mxu0 0
  %1145 = vmatmul.mubr.bf16.gmra.mrb[0].mxu0 %v1068
  %v1146 = vpop.f32.mrb[0].mxu0
  %v1147 = vadd.f32 0.0, %v1146
  %v1148 = vpop.f32.mrb[0].mxu0
  %v1149 = vpop.f32.mrb[0].mxu0
  %v1150 = vpop.f32.mrb[0].mxu0
  %1151 = vdwg.mxu0
  %v1153 = vrot.slane %v1147, 4
  %v1155 = vadd.f32 %v258, %v1153
  %v1156 = vxor.u32 %v1155, 2147483648
  %v1157 = vmul.f32 %v1156, 1.442695
  %v1158 = vpow.pop %v1157
  %v1159 = vadd.f32 %v1158, 1.0
  %v1160 = vrcp.pop %v1159
  %v1161 = vmul.f32 1.0, %v1160
  %v1162 = vtanh.pop %v1155
  %v1164 = vrot.slane %v1055, 6
  %v1166 = vmul.f32 %v1161, %v1164
  %1168 = vrot.lane.b32.xlu0 %v1162, 64
  %v1169 = vpop.permute.xlu0 %1168
  %v1171 = vmul.f32 %v1161, %v1169
  %1173 = vrot.lane.b32.xlu0 %v1171, 32
  %v1174 = vpop.permute.xlu0 %1173
  %v1176 = vadd.f32 %v1166, %v1174
  %v1177 = vtanh.pop %v1176
  %1179 = vrot.lane.b32.xlu0 %v1177, 64
  %v1180 = vpop.permute.xlu0 %1179
  %v1182 = vmul.f32 %v1161, %v1180
  %v1183 = vpack.c.bf16 %v1182, %v1182
  %v1185 = vrot.slane %v1183, 2
  %1186 = vrot.lane.b32.xlu0 %v1185, 32
  %v1187 = vpop.permute.xlu0 %1186
  %v1189 = vsel %vm62, %v1187, 0
  %1191 = vmatprep.subr.bf16.mxu0 0
  %1192 = vmatpush1.bf16.msra.mxu0 %v271
  %1193 = vmatprep.subr.bf16.mxu0 0
  %1194 = vmatpush1.bf16.msra.mxu0 %v272
  %1195 = vmatprep.subr.bf16.mxu0 0
  %1196 = vmatpush1.bf16.msra.mxu0 0
  %1197 = vmatprep.subr.bf16.mxu0 0
  %1198 = vmatpush1.bf16.msra.mxu0 0
  %1199 = vmatprep.subr.bf16.mxu0 0
  %1200 = vmatpush1.bf16.msra.mxu0 0
  %1201 = vmatprep.subr.bf16.mxu0 0
  %1202 = vmatpush1.bf16.msra.mxu0 0
  %1203 = vmatprep.subr.bf16.mxu0 0
  %1204 = vmatpush1.bf16.msra.mxu0 0
  %1205 = vmatprep.subr.bf16.mxu0 0
  %1206 = vmatpush1.bf16.msra.mxu0 0
  %1207 = vmatprep.subr.bf16.mxu0 0
  %1208 = vmatpush1.bf16.msra.mxu0 0
  %1209 = vmatprep.subr.bf16.mxu0 0
  %1210 = vmatpush1.bf16.msra.mxu0 0
  %1211 = vmatprep.subr.bf16.mxu0 0
  %1212 = vmatpush1.bf16.msra.mxu0 0
  %1213 = vmatprep.subr.bf16.mxu0 0
  %1214 = vmatpush1.bf16.msra.mxu0 0
  %1215 = vmatprep.subr.bf16.mxu0 0
  %1216 = vmatpush1.bf16.msra.mxu0 0
  %1217 = vmatprep.subr.bf16.mxu0 0
  %1218 = vmatpush1.bf16.msra.mxu0 0
  %1219 = vmatprep.subr.bf16.mxu0 0
  %1220 = vmatpush1.bf16.msra.mxu0 0
  %1221 = vmatprep.subr.bf16.mxu0 0
  %1222 = vmatpush1.bf16.msra.mxu0 0
  %1223 = vmatprep.mubr.bf16.mxu0 0
  %1224 = vmatmul.mubr.bf16.gmra.mrb[0].mxu0 %v1189
  %v1225 = vpop.f32.mrb[0].mxu0
  %v1226 = vadd.f32 %v278, %v1225
  %v1227 = vpop.f32.mrb[0].mxu0
  %v1228 = vpop.f32.mrb[0].mxu0
  %v1229 = vpop.f32.mrb[0].mxu0
  %1230 = vdwg.mxu0
  %s1231 = scalar_lea.vmem %s10, 14
  %1232 = vst.msk [vmem:[%s1231] sm:$0x3] %vm395, %v1226
  // Predicated region
  $region42: #{decoder_forward.1} parent=0 // pred_check
    _
  $region43: #{decoder_forward.1} parent=0 // pred_check_branch
    %1234 = sbr.rel (0) target = $region45
  $region44: #{decoder_forward.1} parent=0 // pred_region
    _
  $region45: #{decoder_forward.1} parent=0 // pred_fallthru
    _
  // Predicated region
  $region46: #{decoder_forward.1} parent=0 // pred_check
    _
  $region47: #{decoder_forward.1} parent=0 // pred_check_branch
    %1236 = sbr.rel (0) target = $region49
  $region48: #{decoder_forward.1} parent=0 // pred_region
    _
  $region49: #{decoder_forward.1} parent=0 // pred_fallthru
    _

</llo_original>
